<compile_context>
chip_gen: v7x
topology: tpu7x:2x2x1
jax: 0.10.0
libtpu: 0.0.40
codegen_flags: <defaults>
</compile_context>

<pallas_src>
import functools

import jax
import jax.numpy as jnp
from jax.experimental import pallas as pl
from jax.experimental.pallas import tpu as pltpu

NEG_SLOPE = 0.01  # torch F.leaky_relu default negative_slope


def _round_up(x, m):
    return (x + m - 1) // m * m


def _cdiv(a, b):
    return -(-a // b)


# --------------------------------------------------------------------------- #
# Kernel
# --------------------------------------------------------------------------- #
def _mlp_kernel(n_hidden_layers, x_ref, *refs):
    """refs = (w0, b0, w1, b1, ..., wL, bL, out_ref).

    Layers 0..n_hidden_layers-1 are the `fcs` Linears (each + leaky_relu);
    layer n_hidden_layers is `output_linear` (no activation).  Weights arrive
    pre-padded (lane-dense) and possibly pre-cast to bf16; biases are f32.
    """
    out_ref = refs[-1]
    param_refs = refs[:-1]
    n_layers = len(param_refs) // 2  # = n_hidden_layers + 1

    h = x_ref[...].astype(jnp.float32)
    for i in range(n_layers):
        w = param_refs[2 * i][...]              # (d_in_pad, d_out_pad) f32/bf16
        b = param_refs[2 * i + 1][...]          # (1, d_out_pad) f32
        lhs = h if w.dtype == h.dtype else h.astype(w.dtype)  # bf16 only if w is bf16
        h = jnp.dot(lhs, w, preferred_element_type=jnp.float32) + b
        if i < n_hidden_layers:
            h = jnp.maximum(h, NEG_SLOPE * h)   # leaky_relu: one VPU mul + max
    out_ref[...] = h.astype(out_ref.dtype)


# --------------------------------------------------------------------------- #
# Parameter preparation (hoist out of the per-call path; do it once)
# --------------------------------------------------------------------------- #
def prepare_mlp_params(weights, biases, *, use_bf16=False):
    """Pad feature dims (hidden/output -> multiples of 128) and optionally
    pre-cast weights to bf16, ONCE.  Zero padding is mathematically inert:
    padded bias columns are 0, leaky_relu(0)=0, padded weight rows are 0."""
    dims = [int(w.shape[0]) for w in weights] + [int(weights[-1].shape[1])]
    # Input feature dim is left unpadded (x stays unpadded in HBM).
    dims_pad = [dims[0]] + [_round_up(d, 128) for d in dims[1:]]

    params = []
    for i, (w, b) in enumerate(zip(weights, biases)):
        d_in, d_out = w.shape
        wp = jnp.pad(w, ((0, dims_pad[i] - d_in), (0, dims_pad[i + 1] - d_out)))
        if use_bf16:
            wp = wp.astype(jnp.bfloat16)  # pre-cast once: halves weight DMA+VMEM
        bp = jnp.pad(b, (0, dims_pad[i + 1] - d_out)).astype(jnp.float32)
        params.append(wp)
        params.append(bp.reshape(1, -1))
    return dict(params=tuple(params), dims=tuple(dims), dims_pad=tuple(dims_pad),
                n_hidden_layers=len(weights) - 1)


# --------------------------------------------------------------------------- #
# Forward
# --------------------------------------------------------------------------- #
def mlp_forward_prepared(x, prepared, *, tile_m=1024):
    """x: (B, N_v, input_dim); prepared: output of prepare_mlp_params."""
    B, N_v, input_dim = x.shape
    M = B * N_v
    dims = prepared["dims"]
    dims_pad = prepared["dims_pad"]
    params = prepared["params"]
    n_hidden_layers = prepared["n_hidden_layers"]
    assert input_dim == dims[0], "input feature dim mismatch with parameters"
    output_dim = dims[-1]
    out_pad = dims_pad[-1]

    # No feature/row padding of x: avoids an extra HBM pass over activations.
    x2d = x.reshape(M, input_dim)

    # ---- row tiling --------------------------------------------------------
    # Never round M up to a whole tile; Pallas masks the ragged last block.
    # Prefer >= 2 (even) grid steps so the "parallel" M axis can be sharded
    # across v7x's two TensorCores.
    tile_cap = max(8, _round_up(min(tile_m, max(M, 1)), 8))
    n_steps = _cdiv(M, tile_cap)
    if M > 16:
        n_steps = max(2, n_steps)
        if n_steps % 2:
            n_steps += 1
    tile_m_eff = max(8, _round_up(_cdiv(M, n_steps), 8))
    grid = (_cdiv(M, tile_m_eff),)

    # ---- specs ---------------------------------------------------------------
    x_spec = pl.BlockSpec((tile_m_eff, input_dim), lambda i: (i, 0))
    out_spec = pl.BlockSpec((tile_m_eff, out_pad), lambda i: (i, 0))

    # ---- cost estimate -------------------------------------------------------
    m_work = grid[0] * tile_m_eff
    flops = 2 * m_work * sum(dims_pad[i] * dims_pad[i + 1]
                             for i in range(len(dims) - 1))
    bytes_accessed = (x2d.size * x2d.dtype.itemsize
                      + M * out_pad * x.dtype.itemsize
                      + sum(int(p.size) * p.dtype.itemsize for p in params))
    cost = pl.CostEstimate(flops=flops, transcendentals=0,
                           bytes_accessed=bytes_accessed)

    # ---- explicit VMEM budget (params resident + pipelined row tiles) -------
    param_bytes = sum(int(p.size) * p.dtype.itemsize for p in params)
    act_bytes = tile_m_eff * max(dims_pad) * 4
    needed = (2 * param_bytes                                  # covers 2x fallback
              + 2 * tile_m_eff * input_dim * x2d.dtype.itemsize
              + 2 * tile_m_eff * out_pad * x.dtype.itemsize
              + 3 * act_bytes)
    vmem_limit = int(min(max(int(needed * 1.5), 32 * 1024 * 1024),
                         64 * 1024 * 1024))

    kernel = functools.partial(_mlp_kernel, n_hidden_layers)
    out_shape = jax.ShapeDtypeStruct((M, out_pad), x.dtype)
    compiler_params = pltpu.CompilerParams(
        dimension_semantics=("parallel",),
        vmem_limit_bytes=vmem_limit)

    def build(single_buffer_params):
        if single_buffer_params:
            # Constant index_map already suppresses re-fetch across grid steps;
            # Buffered(1) additionally halves the params' VMEM residency.
            param_specs = [pl.BlockSpec(p.shape, lambda i: (0, 0),
                                        pipeline_mode=pl.Buffered(1))
                           for p in params]
        else:
            param_specs = [pl.BlockSpec(p.shape, lambda i: (0, 0))
                           for p in params]
        return pl.pallas_call(
            kernel,
            out_shape=out_shape,
            grid_spec=pltpu.PrefetchScalarGridSpec(
                num_scalar_prefetch=0,
                grid=grid,
                in_specs=[x_spec] + param_specs,
                out_specs=out_spec),
            compiler_params=compiler_params,
            cost_estimate=cost)

    try:
        out2d = build(True)(x2d, *params)
    except Exception:
        # pipeline_mode=pl.Buffered(1) unsupported on this jax build: fall back
        # to default double-buffered resident params (same math, more VMEM).
        out2d = build(False)(x2d, *params)

    return out2d[:, :output_dim].reshape(B, N_v, output_dim)


def mlp_forward(x, weights, biases, *, tile_m=1024, use_bf16=False):
    """Convenience wrapper: pads params per call.  For hot paths, call
    prepare_mlp_params once and reuse it via mlp_forward_prepared."""
    prepared = prepare_mlp_params(weights, biases, use_bf16=use_bf16)
    return mlp_forward_prepared(x, prepared, tile_m=tile_m)


# --------------------------------------------------------------------------- #
# Init + pure-JAX reference
# --------------------------------------------------------------------------- #
def init_mlp_params(key, input_dim, output_dim, hidden_dim, hidden_layers):
    """Mimics torch.nn.Linear default init: U(-1/sqrt(fan_in), 1/sqrt(fan_in))."""
    dims = [input_dim] + [hidden_dim] * hidden_layers + [output_dim]
    weights, biases = [], []
    for i in range(len(dims) - 1):
        d_in, d_out = dims[i], dims[i + 1]
        key, kw, kb = jax.random.split(key, 3)
        bound = 1.0 / jnp.sqrt(jnp.float32(d_in))
        weights.append(jax.random.uniform(kw, (d_in, d_out), jnp.float32,
                                          -bound, bound))
        biases.append(jax.random.uniform(kb, (d_out,), jnp.float32,
                                         -bound, bound))
    return weights, biases


def mlp_ref(x, weights, biases):
    """Pure-JAX reference matching the PyTorch forward."""
    B, N_v, D = x.shape
    h = x.reshape(B * N_v, D)
    n_hidden = len(weights) - 1
    for i in range(n_hidden):
        h = h @ weights[i] + biases[i]
        h = jnp.where(h > 0, h, NEG_SLOPE * h)
    out = h @ weights[-1] + biases[-1]
    return out.reshape(B, N_v, -1)


# --------------------------------------------------------------------------- #
if __name__ == "__main__":
    key = jax.random.PRNGKey(0)
    key, kx, kp, kx2 = jax.random.split(key, 4)

    # small shapes consistent with the module (dropout_rate is unused in forward)
    B, N_v, input_dim = 2, 8, 16
    hidden_dim, hidden_layers, output_dim = 32, 4, 8

    x = jax.random.normal(kx, (B, N_v, input_dim), jnp.float32)
    weights, biases = init_mlp_params(kp, input_dim, output_dim,
                                      hidden_dim, hidden_layers)

    # Pad/park parameters ONCE (hoisted out of the per-call path).
    prep_f32 = prepare_mlp_params(weights, biases, use_bf16=False)

    out = jax.block_until_ready(mlp_forward_prepared(x, prep_f32))
    ref = mlp_ref(x, weights, biases)
    assert out.shape == (B, N_v, output_dim)
    assert jnp.allclose(out, ref, atol=1e-5, rtol=1e-5), "mismatch vs reference"

    # larger M: multi-step even grid with a ragged last row-tile (no dead-row
    # padding), reusing the already-prepared params.
    N_v2 = 650  # M = 1300 -> 2 tiles of 656 rows, second tile ragged
    x2 = jax.random.normal(kx2, (B, N_v2, input_dim), jnp.float32)
    out2 = jax.block_until_ready(mlp_forward_prepared(x2, prep_f32))
    ref2 = mlp_ref(x2, weights, biases)
    assert out2.shape == (B, N_v2, output_dim)
    assert jnp.allclose(out2, ref2, atol=1e-5, rtol=1e-5), "mismatch (large M)"

    # bf16 MXU-operand path (weights pre-cast once, f32 accumulate): loose tol.
    prep_bf16 = prepare_mlp_params(weights, biases, use_bf16=True)
    out3 = jax.block_until_ready(mlp_forward_prepared(x2, prep_bf16))
    assert out3.shape == (B, N_v2, output_dim)
    assert jnp.allclose(out3, ref2, atol=5e-2, rtol=5e-2), "mismatch (bf16 path)"

    print("KERNEL_OK")
</pallas_src>

<mosaic_0001>
module attributes {stable_mosaic.version = 11 : i64} {
  func.func @_mlp_kernel(%arg0: i32, %arg1: memref<16x16xf32, #tpu.memory_space<vmem>>, %arg2: memref<16x128xf32, #tpu.memory_space<vmem>>, %arg3: memref<1x128xf32, #tpu.memory_space<vmem>>, %arg4: memref<128x128xf32, #tpu.memory_space<vmem>>, %arg5: memref<1x128xf32, #tpu.memory_space<vmem>>, %arg6: memref<128x128xf32, #tpu.memory_space<vmem>>, %arg7: memref<1x128xf32, #tpu.memory_space<vmem>>, %arg8: memref<128x128xf32, #tpu.memory_space<vmem>>, %arg9: memref<1x128xf32, #tpu.memory_space<vmem>>, %arg10: memref<128x128xf32, #tpu.memory_space<vmem>>, %arg11: memref<1x128xf32, #tpu.memory_space<vmem>>, %arg12: memref<16x128xf32, #tpu.memory_space<vmem>>) attributes {dimension_semantics = [#tpu.dimension_semantics<parallel>], iteration_bounds = array<i64: 1>, scalar_prefetch = 0 : i64, scratch_operands = 0 : i64, tpu.core_type = #tpu.core_type<tc>, window_params = [{transform_indices = @transform_0, window_bounds = array<i64: 16, 16>}, {pipeline_mode = #tpu.pipeline_mode<synchronous>, transform_indices = @transform_1, window_bounds = array<i64: 16, 128>}, {pipeline_mode = #tpu.pipeline_mode<synchronous>, transform_indices = @transform_2, window_bounds = array<i64: 1, 128>}, {pipeline_mode = #tpu.pipeline_mode<synchronous>, transform_indices = @transform_3, window_bounds = array<i64: 128, 128>}, {pipeline_mode = #tpu.pipeline_mode<synchronous>, transform_indices = @transform_4, window_bounds = array<i64: 1, 128>}, {pipeline_mode = #tpu.pipeline_mode<synchronous>, transform_indices = @transform_5, window_bounds = array<i64: 128, 128>}, {pipeline_mode = #tpu.pipeline_mode<synchronous>, transform_indices = @transform_6, window_bounds = array<i64: 1, 128>}, {pipeline_mode = #tpu.pipeline_mode<synchronous>, transform_indices = @transform_7, window_bounds = array<i64: 128, 128>}, {pipeline_mode = #tpu.pipeline_mode<synchronous>, transform_indices = @transform_8, window_bounds = array<i64: 1, 128>}, {pipeline_mode = #tpu.pipeline_mode<synchronous>, transform_indices = @transform_9, window_bounds = array<i64: 128, 128>}, {pipeline_mode = #tpu.pipeline_mode<synchronous>, transform_indices = @transform_10, window_bounds = array<i64: 1, 128>}, {transform_indices = @transform_11, window_bounds = array<i64: 16, 128>}]} {
    %c0 = arith.constant 0 : index
    %c0_0 = arith.constant 0 : index
    %0 = vector.load %arg1[%c0, %c0_0] : memref<16x16xf32, #tpu.memory_space<vmem>>, vector<16x16xf32>
    %c0_1 = arith.constant 0 : index
    %c0_2 = arith.constant 0 : index
    %1 = vector.load %arg2[%c0_1, %c0_2] : memref<16x128xf32, #tpu.memory_space<vmem>>, vector<16x128xf32>
    %c0_3 = arith.constant 0 : index
    %c0_4 = arith.constant 0 : index
    %2 = vector.load %arg3[%c0_3, %c0_4] : memref<1x128xf32, #tpu.memory_space<vmem>>, vector<1x128xf32>
    %cst = arith.constant dense<0.000000e+00> : vector<16x128xf32>
    %3 = tpu.matmul %0, %1, %cst {dimension_numbers = #tpu.dot_dimension_numbers<[1], [0], [0], [1], [0, 0, 1, 1], [], []>} : vector<16x16xf32>, vector<16x128xf32>, vector<16x128xf32> -> vector<16x128xf32>
    %4 = vector.broadcast %2 : vector<1x128xf32> to vector<16x128xf32>
    %5 = arith.addf %3, %4 : vector<16x128xf32>
    %cst_5 = arith.constant 0.00999999977 : f32
    %6 = vector.broadcast %cst_5 : f32 to vector<16x128xf32>
    %7 = arith.mulf %6, %5 : vector<16x128xf32>
    %8 = arith.maximumf %5, %7 : vector<16x128xf32>
    %c0_6 = arith.constant 0 : index
    %c0_7 = arith.constant 0 : index
    %9 = vector.load %arg4[%c0_6, %c0_7] : memref<128x128xf32, #tpu.memory_space<vmem>>, vector<128x128xf32>
    %c0_8 = arith.constant 0 : index
    %c0_9 = arith.constant 0 : index
    %10 = vector.load %arg5[%c0_8, %c0_9] : memref<1x128xf32, #tpu.memory_space<vmem>>, vector<1x128xf32>
    %cst_10 = arith.constant dense<0.000000e+00> : vector<16x128xf32>
    %11 = tpu.matmul %8, %9, %cst_10 {dimension_numbers = #tpu.dot_dimension_numbers<[1], [0], [0], [1], [0, 0, 1, 1], [], []>} : vector<16x128xf32>, vector<128x128xf32>, vector<16x128xf32> -> vector<16x128xf32>
    %12 = vector.broadcast %10 : vector<1x128xf32> to vector<16x128xf32>
    %13 = arith.addf %11, %12 : vector<16x128xf32>
    %cst_11 = arith.constant 0.00999999977 : f32
    %14 = vector.broadcast %cst_11 : f32 to vector<16x128xf32>
    %15 = arith.mulf %14, %13 : vector<16x128xf32>
    %16 = arith.maximumf %13, %15 : vector<16x128xf32>
    %c0_12 = arith.constant 0 : index
    %c0_13 = arith.constant 0 : index
    %17 = vector.load %arg6[%c0_12, %c0_13] : memref<128x128xf32, #tpu.memory_space<vmem>>, vector<128x128xf32>
    %c0_14 = arith.constant 0 : index
    %c0_15 = arith.constant 0 : index
    %18 = vector.load %arg7[%c0_14, %c0_15] : memref<1x128xf32, #tpu.memory_space<vmem>>, vector<1x128xf32>
    %cst_16 = arith.constant dense<0.000000e+00> : vector<16x128xf32>
    %19 = tpu.matmul %16, %17, %cst_16 {dimension_numbers = #tpu.dot_dimension_numbers<[1], [0], [0], [1], [0, 0, 1, 1], [], []>} : vector<16x128xf32>, vector<128x128xf32>, vector<16x128xf32> -> vector<16x128xf32>
    %20 = vector.broadcast %18 : vector<1x128xf32> to vector<16x128xf32>
    %21 = arith.addf %19, %20 : vector<16x128xf32>
    %cst_17 = arith.constant 0.00999999977 : f32
    %22 = vector.broadcast %cst_17 : f32 to vector<16x128xf32>
    %23 = arith.mulf %22, %21 : vector<16x128xf32>
    %24 = arith.maximumf %21, %23 : vector<16x128xf32>
    %c0_18 = arith.constant 0 : index
    %c0_19 = arith.constant 0 : index
    %25 = vector.load %arg8[%c0_18, %c0_19] : memref<128x128xf32, #tpu.memory_space<vmem>>, vector<128x128xf32>
    %c0_20 = arith.constant 0 : index
    %c0_21 = arith.constant 0 : index
    %26 = vector.load %arg9[%c0_20, %c0_21] : memref<1x128xf32, #tpu.memory_space<vmem>>, vector<1x128xf32>
    %cst_22 = arith.constant dense<0.000000e+00> : vector<16x128xf32>
    %27 = tpu.matmul %24, %25, %cst_22 {dimension_numbers = #tpu.dot_dimension_numbers<[1], [0], [0], [1], [0, 0, 1, 1], [], []>} : vector<16x128xf32>, vector<128x128xf32>, vector<16x128xf32> -> vector<16x128xf32>
    %28 = vector.broadcast %26 : vector<1x128xf32> to vector<16x128xf32>
    %29 = arith.addf %27, %28 : vector<16x128xf32>
    %cst_23 = arith.constant 0.00999999977 : f32
    %30 = vector.broadcast %cst_23 : f32 to vector<16x128xf32>
    %31 = arith.mulf %30, %29 : vector<16x128xf32>
    %32 = arith.maximumf %29, %31 : vector<16x128xf32>
    %c0_24 = arith.constant 0 : index
    %c0_25 = arith.constant 0 : index
    %33 = vector.load %arg10[%c0_24, %c0_25] : memref<128x128xf32, #tpu.memory_space<vmem>>, vector<128x128xf32>
    %c0_26 = arith.constant 0 : index
    %c0_27 = arith.constant 0 : index
    %34 = vector.load %arg11[%c0_26, %c0_27] : memref<1x128xf32, #tpu.memory_space<vmem>>, vector<1x128xf32>
    %cst_28 = arith.constant dense<0.000000e+00> : vector<16x128xf32>
    %35 = tpu.matmul %32, %33, %cst_28 {dimension_numbers = #tpu.dot_dimension_numbers<[1], [0], [0], [1], [0, 0, 1, 1], [], []>} : vector<16x128xf32>, vector<128x128xf32>, vector<16x128xf32> -> vector<16x128xf32>
    %36 = vector.broadcast %34 : vector<1x128xf32> to vector<16x128xf32>
    %37 = arith.addf %35, %36 : vector<16x128xf32>
    %c0_29 = arith.constant 0 : index
    %c0_30 = arith.constant 0 : index
    %38 = vector.load %arg12[%c0_29, %c0_30] : memref<16x128xf32, #tpu.memory_space<vmem>>, vector<16x128xf32>
    tpu.vector_store %arg12[%c0_29, %c0_30], %37 {strides = array<i32>} : memref<16x128xf32, #tpu.memory_space<vmem>>, vector<16x128xf32>,
    return
  }
  func.func @transform_0(%arg0: i32) -> (i32, i32) {
    %c0_i32 = arith.constant 0 : i32
    %c0_i32_0 = arith.constant 0 : i32
    return %arg0, %c0_i32 : i32, i32
  }
  func.func @transform_1(%arg0: i32) -> (i32, i32) {
    %c0_i32 = arith.constant 0 : i32
    %c0_i32_0 = arith.constant 0 : i32
    %c0_i32_1 = arith.constant 0 : i32
    return %c0_i32, %c0_i32_0 : i32, i32
  }
  func.func @transform_2(%arg0: i32) -> (i32, i32) {
    %c0_i32 = arith.constant 0 : i32
    %c0_i32_0 = arith.constant 0 : i32
    %c0_i32_1 = arith.constant 0 : i32
    return %c0_i32, %c0_i32_0 : i32, i32
  }
  func.func @transform_3(%arg0: i32) -> (i32, i32) {
    %c0_i32 = arith.constant 0 : i32
    %c0_i32_0 = arith.constant 0 : i32
    %c0_i32_1 = arith.constant 0 : i32
    return %c0_i32, %c0_i32_0 : i32, i32
  }
  func.func @transform_4(%arg0: i32) -> (i32, i32) {
    %c0_i32 = arith.constant 0 : i32
    %c0_i32_0 = arith.constant 0 : i32
    %c0_i32_1 = arith.constant 0 : i32
    return %c0_i32, %c0_i32_0 : i32, i32
  }
  func.func @transform_5(%arg0: i32) -> (i32, i32) {
    %c0_i32 = arith.constant 0 : i32
    %c0_i32_0 = arith.constant 0 : i32
    %c0_i32_1 = arith.constant 0 : i32
    return %c0_i32, %c0_i32_0 : i32, i32
  }
  func.func @transform_6(%arg0: i32) -> (i32, i32) {
    %c0_i32 = arith.constant 0 : i32
    %c0_i32_0 = arith.constant 0 : i32
    %c0_i32_1 = arith.constant 0 : i32
    return %c0_i32, %c0_i32_0 : i32, i32
  }
  func.func @transform_7(%arg0: i32) -> (i32, i32) {
    %c0_i32 = arith.constant 0 : i32
    %c0_i32_0 = arith.constant 0 : i32
    %c0_i32_1 = arith.constant 0 : i32
    return %c0_i32, %c0_i32_0 : i32, i32
  }
  func.func @transform_8(%arg0: i32) -> (i32, i32) {
    %c0_i32 = arith.constant 0 : i32
    %c0_i32_0 = arith.constant 0 : i32
    %c0_i32_1 = arith.constant 0 : i32
    return %c0_i32, %c0_i32_0 : i32, i32
  }
  func.func @transform_9(%arg0: i32) -> (i32, i32) {
    %c0_i32 = arith.constant 0 : i32
    %c0_i32_0 = arith.constant 0 : i32
    %c0_i32_1 = arith.constant 0 : i32
    return %c0_i32, %c0_i32_0 : i32, i32
  }
  func.func @transform_10(%arg0: i32) -> (i32, i32) {
    %c0_i32 = arith.constant 0 : i32
    %c0_i32_0 = arith.constant 0 : i32
    %c0_i32_1 = arith.constant 0 : i32
    return %c0_i32, %c0_i32_0 : i32, i32
  }
  func.func @transform_11(%arg0: i32) -> (i32, i32) {
    %c0_i32 = arith.constant 0 : i32
    %c0_i32_0 = arith.constant 0 : i32
    return %arg0, %c0_i32 : i32, i32
  }
}

module attributes {stable_mosaic.version = 11 : i64} {
  func.func @_mlp_kernel(%arg0: i32, %arg1: memref<16x16xf32, #tpu.memory_space<vmem>>, %arg2: memref<16x128xf32, #tpu.memory_space<vmem>>, %arg3: memref<1x128xf32, #tpu.memory_space<vmem>>, %arg4: memref<128x128xf32, #tpu.memory_space<vmem>>, %arg5: memref<1x128xf32, #tpu.memory_space<vmem>>, %arg6: memref<128x128xf32, #tpu.memory_space<vmem>>, %arg7: memref<1x128xf32, #tpu.memory_space<vmem>>, %arg8: memref<128x128xf32, #tpu.memory_space<vmem>>, %arg9: memref<1x128xf32, #tpu.memory_space<vmem>>, %arg10: memref<128x128xf32, #tpu.memory_space<vmem>>, %arg11: memref<1x128xf32, #tpu.memory_space<vmem>>, %arg12: memref<16x128xf32, #tpu.memory_space<vmem>>) attributes {dimension_semantics = [#tpu.dimension_semantics<parallel>], iteration_bounds = array<i64: 1>, scalar_prefetch = 0 : i64, scratch_operands = 0 : i64, tpu.core_type = #tpu.core_type<tc>, window_params = [{transform_indices = @transform_0, window_bounds = array<i64: 16, 16>}, {pipeline_mode = #tpu.pipeline_mode<synchronous>, transform_indices = @transform_1, window_bounds = array<i64: 16, 128>}, {pipeline_mode = #tpu.pipeline_mode<synchronous>, transform_indices = @transform_2, window_bounds = array<i64: 1, 128>}, {pipeline_mode = #tpu.pipeline_mode<synchronous>, transform_indices = @transform_3, window_bounds = array<i64: 128, 128>}, {pipeline_mode = #tpu.pipeline_mode<synchronous>, transform_indices = @transform_4, window_bounds = array<i64: 1, 128>}, {pipeline_mode = #tpu.pipeline_mode<synchronous>, transform_indices = @transform_5, window_bounds = array<i64: 128, 128>}, {pipeline_mode = #tpu.pipeline_mode<synchronous>, transform_indices = @transform_6, window_bounds = array<i64: 1, 128>}, {pipeline_mode = #tpu.pipeline_mode<synchronous>, transform_indices = @transform_7, window_bounds = array<i64: 128, 128>}, {pipeline_mode = #tpu.pipeline_mode<synchronous>, transform_indices = @transform_8, window_bounds = array<i64: 1, 128>}, {pipeline_mode = #tpu.pipeline_mode<synchronous>, transform_indices = @transform_9, window_bounds = array<i64: 128, 128>}, {pipeline_mode = #tpu.pipeline_mode<synchronous>, transform_indices = @transform_10, window_bounds = array<i64: 1, 128>}, {transform_indices = @transform_11, window_bounds = array<i64: 16, 128>}]} {
    %c0 = arith.constant 0 : index
    %c0_0 = arith.constant 0 : index
    %0 = vector.load %arg1[%c0, %c0_0] : memref<16x16xf32, #tpu.memory_space<vmem>>, vector<16x16xf32>
    %c0_1 = arith.constant 0 : index
    %c0_2 = arith.constant 0 : index
    %1 = vector.load %arg2[%c0_1, %c0_2] : memref<16x128xf32, #tpu.memory_space<vmem>>, vector<16x128xf32>
    %c0_3 = arith.constant 0 : index
    %c0_4 = arith.constant 0 : index
    %2 = vector.load %arg3[%c0_3, %c0_4] : memref<1x128xf32, #tpu.memory_space<vmem>>, vector<1x128xf32>
    %cst = arith.constant dense<0.000000e+00> : vector<16x128xf32>
    %3 = tpu.matmul %0, %1, %cst {dimension_numbers = #tpu.dot_dimension_numbers<[1], [0], [0], [1], [0, 0, 1, 1], [], []>} : vector<16x16xf32>, vector<16x128xf32>, vector<16x128xf32> -> vector<16x128xf32>
    %4 = vector.broadcast %2 : vector<1x128xf32> to vector<16x128xf32>
    %5 = arith.addf %3, %4 : vector<16x128xf32>
    %cst_5 = arith.constant 0.00999999977 : f32
    %6 = vector.broadcast %cst_5 : f32 to vector<16x128xf32>
    %7 = arith.mulf %6, %5 : vector<16x128xf32>
    %8 = arith.maximumf %5, %7 : vector<16x128xf32>
    %c0_6 = arith.constant 0 : index
    %c0_7 = arith.constant 0 : index
    %9 = vector.load %arg4[%c0_6, %c0_7] : memref<128x128xf32, #tpu.memory_space<vmem>>, vector<128x128xf32>
    %c0_8 = arith.constant 0 : index
    %c0_9 = arith.constant 0 : index
    %10 = vector.load %arg5[%c0_8, %c0_9] : memref<1x128xf32, #tpu.memory_space<vmem>>, vector<1x128xf32>
    %cst_10 = arith.constant dense<0.000000e+00> : vector<16x128xf32>
    %11 = tpu.matmul %8, %9, %cst_10 {dimension_numbers = #tpu.dot_dimension_numbers<[1], [0], [0], [1], [0, 0, 1, 1], [], []>} : vector<16x128xf32>, vector<128x128xf32>, vector<16x128xf32> -> vector<16x128xf32>
    %12 = vector.broadcast %10 : vector<1x128xf32> to vector<16x128xf32>
    %13 = arith.addf %11, %12 : vector<16x128xf32>
    %cst_11 = arith.constant 0.00999999977 : f32
    %14 = vector.broadcast %cst_11 : f32 to vector<16x128xf32>
    %15 = arith.mulf %14, %13 : vector<16x128xf32>
    %16 = arith.maximumf %13, %15 : vector<16x128xf32>
    %c0_12 = arith.constant 0 : index
    %c0_13 = arith.constant 0 : index
    %17 = vector.load %arg6[%c0_12, %c0_13] : memref<128x128xf32, #tpu.memory_space<vmem>>, vector<128x128xf32>
    %c0_14 = arith.constant 0 : index
    %c0_15 = arith.constant 0 : index
    %18 = vector.load %arg7[%c0_14, %c0_15] : memref<1x128xf32, #tpu.memory_space<vmem>>, vector<1x128xf32>
    %cst_16 = arith.constant dense<0.000000e+00> : vector<16x128xf32>
    %19 = tpu.matmul %16, %17, %cst_16 {dimension_numbers = #tpu.dot_dimension_numbers<[1], [0], [0], [1], [0, 0, 1, 1], [], []>} : vector<16x128xf32>, vector<128x128xf32>, vector<16x128xf32> -> vector<16x128xf32>
    %20 = vector.broadcast %18 : vector<1x128xf32> to vector<16x128xf32>
    %21 = arith.addf %19, %20 : vector<16x128xf32>
    %cst_17 = arith.constant 0.00999999977 : f32
    %22 = vector.broadcast %cst_17 : f32 to vector<16x128xf32>
    %23 = arith.mulf %22, %21 : vector<16x128xf32>
    %24 = arith.maximumf %21, %23 : vector<16x128xf32>
    %c0_18 = arith.constant 0 : index
    %c0_19 = arith.constant 0 : index
    %25 = vector.load %arg8[%c0_18, %c0_19] : memref<128x128xf32, #tpu.memory_space<vmem>>, vector<128x128xf32>
    %c0_20 = arith.constant 0 : index
    %c0_21 = arith.constant 0 : index
    %26 = vector.load %arg9[%c0_20, %c0_21] : memref<1x128xf32, #tpu.memory_space<vmem>>, vector<1x128xf32>
    %cst_22 = arith.constant dense<0.000000e+00> : vector<16x128xf32>
    %27 = tpu.matmul %24, %25, %cst_22 {dimension_numbers = #tpu.dot_dimension_numbers<[1], [0], [0], [1], [0, 0, 1, 1], [], []>} : vector<16x128xf32>, vector<128x128xf32>, vector<16x128xf32> -> vector<16x128xf32>
    %28 = vector.broadcast %26 : vector<1x128xf32> to vector<16x128xf32>
    %29 = arith.addf %27, %28 : vector<16x128xf32>
    %cst_23 = arith.constant 0.00999999977 : f32
    %30 = vector.broadcast %cst_23 : f32 to vector<16x128xf32>
    %31 = arith.mulf %30, %29 : vector<16x128xf32>
    %32 = arith.maximumf %29, %31 : vector<16x128xf32>
    %c0_24 = arith.constant 0 : index
    %c0_25 = arith.constant 0 : index
    %33 = vector.load %arg10[%c0_24, %c0_25] : memref<128x128xf32, #tpu.memory_space<vmem>>, vector<128x128xf32>
    %c0_26 = arith.constant 0 : index
    %c0_27 = arith.constant 0 : index
    %34 = vector.load %arg11[%c0_26, %c0_27] : memref<1x128xf32, #tpu.memory_space<vmem>>, vector<1x128xf32>
    %cst_28 = arith.constant dense<0.000000e+00> : vector<16x128xf32>
    %35 = tpu.matmul %32, %33, %cst_28 {dimension_numbers = #tpu.dot_dimension_numbers<[1], [0], [0], [1], [0, 0, 1, 1], [], []>} : vector<16x128xf32>, vector<128x128xf32>, vector<16x128xf32> -> vector<16x128xf32>
    %36 = vector.broadcast %34 : vector<1x128xf32> to vector<16x128xf32>
    %37 = arith.addf %35, %36 : vector<16x128xf32>
    %c0_29 = arith.constant 0 : index
    %c0_30 = arith.constant 0 : index
    %38 = vector.load %arg12[%c0_29, %c0_30] : memref<16x128xf32, #tpu.memory_space<vmem>>, vector<16x128xf32>
    tpu.vector_store %arg12[%c0_29, %c0_30], %37 {strides = array<i32>} : memref<16x128xf32, #tpu.memory_space<vmem>>, vector<16x128xf32>,
    return
  }
  func.func @transform_0(%arg0: i32) -> (i32, i32) {
    %c0_i32 = arith.constant 0 : i32
    %c0_i32_0 = arith.constant 0 : i32
    return %arg0, %c0_i32 : i32, i32
  }
  func.func @transform_1(%arg0: i32) -> (i32, i32) {
    %c0_i32 = arith.constant 0 : i32
    %c0_i32_0 = arith.constant 0 : i32
    %c0_i32_1 = arith.constant 0 : i32
    return %c0_i32, %c0_i32_0 : i32, i32
  }
  func.func @transform_2(%arg0: i32) -> (i32, i32) {
    %c0_i32 = arith.constant 0 : i32
    %c0_i32_0 = arith.constant 0 : i32
    %c0_i32_1 = arith.constant 0 : i32
    return %c0_i32, %c0_i32_0 : i32, i32
  }
  func.func @transform_3(%arg0: i32) -> (i32, i32) {
    %c0_i32 = arith.constant 0 : i32
    %c0_i32_0 = arith.constant 0 : i32
    %c0_i32_1 = arith.constant 0 : i32
    return %c0_i32, %c0_i32_0 : i32, i32
  }
  func.func @transform_4(%arg0: i32) -> (i32, i32) {
    %c0_i32 = arith.constant 0 : i32
    %c0_i32_0 = arith.constant 0 : i32
    %c0_i32_1 = arith.constant 0 : i32
    return %c0_i32, %c0_i32_0 : i32, i32
  }
  func.func @transform_5(%arg0: i32) -> (i32, i32) {
    %c0_i32 = arith.constant 0 : i32
    %c0_i32_0 = arith.constant 0 : i32
    %c0_i32_1 = arith.constant 0 : i32
    return %c0_i32, %c0_i32_0 : i32, i32
  }
  func.func @transform_6(%arg0: i32) -> (i32, i32) {
    %c0_i32 = arith.constant 0 : i32
    %c0_i32_0 = arith.constant 0 : i32
    %c0_i32_1 = arith.constant 0 : i32
    return %c0_i32, %c0_i32_0 : i32, i32
  }
  func.func @transform_7(%arg0: i32) -> (i32, i32) {
    %c0_i32 = arith.constant 0 : i32
    %c0_i32_0 = arith.constant 0 : i32
    %c0_i32_1 = arith.constant 0 : i32
    return %c0_i32, %c0_i32_0 : i32, i32
  }
  func.func @transform_8(%arg0: i32) -> (i32, i32) {
    %c0_i32 = arith.constant 0 : i32
    %c0_i32_0 = arith.constant 0 : i32
    %c0_i32_1 = arith.constant 0 : i32
    return %c0_i32, %c0_i32_0 : i32, i32
  }
  func.func @transform_9(%arg0: i32) -> (i32, i32) {
    %c0_i32 = arith.constant 0 : i32
    %c0_i32_0 = arith.constant 0 : i32
    %c0_i32_1 = arith.constant 0 : i32
    return %c0_i32, %c0_i32_0 : i32, i32
  }
  func.func @transform_10(%arg0: i32) -> (i32, i32) {
    %c0_i32 = arith.constant 0 : i32
    %c0_i32_0 = arith.constant 0 : i32
    %c0_i32_1 = arith.constant 0 : i32
    return %c0_i32, %c0_i32_0 : i32, i32
  }
  func.func @transform_11(%arg0: i32) -> (i32, i32) {
    %c0_i32 = arith.constant 0 : i32
    %c0_i32_0 = arith.constant 0 : i32
    return %arg0, %c0_i32 : i32, i32
  }
}

</mosaic_0001>

<llo_original>
// kernel: tpu_custom_call.1
$region0: #{tpu_custom_call.1}
  #allocation0 [shape = 'u32[]', space=smem, size = 0x4, offset = 0x4, fixed_abs, tag = 'smem constant byte address 0x4 - core index']
  #allocation1 [shape = 'u32[144,128]{1,0:T(1,128)}', space=vmem, size = 0x12000, scoped, tag = 'internal scratch']
  %s0 = inlined_call_operand.hbm [shape: f32[16,16], index: 0, kind: input, shape index: {}]
  %s1 = inlined_call_operand.hbm [shape: f32[16,128], index: 1, kind: input, shape index: {}]
  %s2 = inlined_call_operand.vmem [shape: f32[1,128], index: 2, kind: input, shape index: {}]
  %s3 = inlined_call_operand.hbm [shape: f32[128,128], index: 3, kind: input, shape index: {}]
  %s4 = inlined_call_operand.vmem [shape: f32[1,128], index: 4, kind: input, shape index: {}]
  %s5 = inlined_call_operand.hbm [shape: f32[128,128], index: 5, kind: input, shape index: {}]
  %s6 = inlined_call_operand.vmem [shape: f32[1,128], index: 6, kind: input, shape index: {}]
  %s7 = inlined_call_operand.hbm [shape: f32[128,128], index: 7, kind: input, shape index: {}]
  %s8 = inlined_call_operand.vmem [shape: f32[1,128], index: 8, kind: input, shape index: {}]
  %s9 = inlined_call_operand.hbm [shape: f32[128,128], index: 9, kind: input, shape index: {}]
  %s10 = inlined_call_operand.vmem [shape: f32[1,128], index: 10, kind: input, shape index: {}]
  %s11 = inlined_call_operand.hbm [shape: f32[16,128], index: 11, kind: output, shape index: {}]
  %s12 = sld [smem:[#allocation0]]
  $region78: #{tpu_custom_call.1} parent=0
    _
  %s14 = ssub.s32 1, %s12
  %s15 = scalar_select 0, %s14, %s12
  $region1: #{tpu_custom_call.1} parent=0
    #allocation2 [shape = 'u8[8192]{0}', space=vmem, size = 0x2000, scoped, tag = 'input window, operand 0, single buffered']
    #allocation3 [shape = 's32[1]{0}', space=sflag, size = 0x4, scoped, tag = 'scoped memory for tpu_custom_call.1']
    #allocation4 [shape = 's32[1]{0}', space=sflag, size = 0x4, scoped, tag = 'scoped memory for tpu_custom_call.1']
    #allocation5 [shape = 'u8[8192]{0}', space=vmem, size = 0x2000, scoped, tag = 'input window, operand 1, single buffered']
    #allocation6 [shape = 's32[1]{0}', space=sflag, size = 0x4, scoped, tag = 'scoped memory for tpu_custom_call.1']
    #allocation7 [shape = 'u8[65536]{0}', space=vmem, size = 0x10000, scoped, tag = 'input window, operand 3, single buffered']
    #allocation8 [shape = 'u8[65536]{0}', space=vmem, size = 0x10000, scoped, tag = 'input window, operand 5, single buffered']
    #allocation9 [shape = 's32[1]{0}', space=sflag, size = 0x4, scoped, tag = 'scoped memory for tpu_custom_call.1']
    #allocation10 [shape = 'u8[65536]{0}', space=vmem, size = 0x10000, scoped, tag = 'input window, operand 7, single buffered']
    #allocation11 [shape = 'u8[65536]{0}', space=vmem, size = 0x10000, scoped, tag = 'input window, operand 9, single buffered']
    #allocation12 [shape = 's32[1]{0}', space=sflag, size = 0x4, scoped, tag = 'scoped memory for tpu_custom_call.1']
    #allocation13 [shape = 'u8[8192]{0}', space=vmem, size = 0x2000, scoped, tag = 'output window, operand 0, single buffered']
    %16 = vsyncpa [#allocation3], 0
    %17 = vsyncpa [#allocation6], 0
    %18 = vsyncpa [#allocation9], 0
    %19 = vsyncpa [#allocation12], 0
    %20 = vsyncpa [#allocation4], 0
    // Predicated region
    $region2: #{tpu_custom_call.1} parent=1 // pred_check
      _
    $region3: #{tpu_custom_call.1} parent=1 // pred_check_branch
      %22 = sbr.rel (0) target = $region5
    $region4: #{tpu_custom_call.1} parent=1 // pred_region
      %s24 = ssub.s32 256, 256
      %25 = vsyncadd [#allocation3], %s24
      %s26 = sshll.u32 [#allocation2], 4
      %s27 = int_to_ptr.vmem [resolvable:$true] %s26
      %32 = dma.hbm_to_vmem [thread:$0]  %s0, 256, %s27, [#allocation3], 128, 128, 8
    $region5: #{tpu_custom_call.1} parent=1 // pred_fallthru
      _
    // Predicated region
    $region6: #{tpu_custom_call.1} parent=1 // pred_check
      _
    $region7: #{tpu_custom_call.1} parent=1 // pred_check_branch
      %34 = sbr.rel (0) target = $region9
    $region8: #{tpu_custom_call.1} parent=1 // pred_region
      %s36 = ssub.s32 256, 256
      %37 = vsyncadd [#allocation6], %s36
      %s38 = sshll.u32 [#allocation5], 4
      %s39 = int_to_ptr.vmem [resolvable:$true] %s38
      %44 = dma.hbm_to_vmem [thread:$0]  %s1, 256, %s39, [#allocation6], 128, 128, 8
    $region9: #{tpu_custom_call.1} parent=1 // pred_fallthru
      _
    // Predicated region
    $region10: #{tpu_custom_call.1} parent=1 // pred_check
      _
    $region11: #{tpu_custom_call.1} parent=1 // pred_check_branch
      %46 = sbr.rel (0) target = $region13
    $region12: #{tpu_custom_call.1} parent=1 // pred_region
      _
    $region13: #{tpu_custom_call.1} parent=1 // pred_fallthru
      _
    // Predicated region
    $region14: #{tpu_custom_call.1} parent=1 // pred_check
      _
    $region15: #{tpu_custom_call.1} parent=1 // pred_check_branch
      %48 = sbr.rel (0) target = $region17
    $region16: #{tpu_custom_call.1} parent=1 // pred_region
      %s50 = ssub.s32 2048, 2048
      %51 = vsyncadd [#allocation6], %s50
      %s52 = sshll.u32 [#allocation7], 4
      %s53 = int_to_ptr.vmem [resolvable:$true] %s52
      %58 = dma.hbm_to_vmem [thread:$0]  %s3, 2048, %s53, [#allocation6], 128, 128, 8
    $region17: #{tpu_custom_call.1} parent=1 // pred_fallthru
      _
    // Predicated region
    $region18: #{tpu_custom_call.1} parent=1 // pred_check
      _
    $region19: #{tpu_custom_call.1} parent=1 // pred_check_branch
      %60 = sbr.rel (0) target = $region21
    $region20: #{tpu_custom_call.1} parent=1 // pred_region
      _
    $region21: #{tpu_custom_call.1} parent=1 // pred_fallthru
      _
    // Predicated region
    $region22: #{tpu_custom_call.1} parent=1 // pred_check
      _
    $region23: #{tpu_custom_call.1} parent=1 // pred_check_branch
      %62 = sbr.rel (0) target = $region25
    $region24: #{tpu_custom_call.1} parent=1 // pred_region
      %s64 = ssub.s32 2048, 2048
      %65 = vsyncadd [#allocation9], %s64
      %s66 = sshll.u32 [#allocation8], 4
      %s67 = int_to_ptr.vmem [resolvable:$true] %s66
      %72 = dma.hbm_to_vmem [thread:$0]  %s5, 2048, %s67, [#allocation9], 128, 128, 8
    $region25: #{tpu_custom_call.1} parent=1 // pred_fallthru
      _
    // Predicated region
    $region26: #{tpu_custom_call.1} parent=1 // pred_check
      _
    $region27: #{tpu_custom_call.1} parent=1 // pred_check_branch
      %74 = sbr.rel (0) target = $region29
    $region28: #{tpu_custom_call.1} parent=1 // pred_region
      _
    $region29: #{tpu_custom_call.1} parent=1 // pred_fallthru
      _
    // Predicated region
    $region30: #{tpu_custom_call.1} parent=1 // pred_check
      _
    $region31: #{tpu_custom_call.1} parent=1 // pred_check_branch
      %76 = sbr.rel (0) target = $region33
    $region32: #{tpu_custom_call.1} parent=1 // pred_region
      %s78 = ssub.s32 2048, 2048
      %79 = vsyncadd [#allocation9], %s78
      %s80 = sshll.u32 [#allocation10], 4
      %s81 = int_to_ptr.vmem [resolvable:$true] %s80
      %86 = dma.hbm_to_vmem [thread:$0]  %s7, 2048, %s81, [#allocation9], 128, 128, 8
    $region33: #{tpu_custom_call.1} parent=1 // pred_fallthru
      _
    // Predicated region
    $region34: #{tpu_custom_call.1} parent=1 // pred_check
      _
    $region35: #{tpu_custom_call.1} parent=1 // pred_check_branch
      %88 = sbr.rel (0) target = $region37
    $region36: #{tpu_custom_call.1} parent=1 // pred_region
      _
    $region37: #{tpu_custom_call.1} parent=1 // pred_fallthru
      _
    // Predicated region
    $region38: #{tpu_custom_call.1} parent=1 // pred_check
      _
    $region39: #{tpu_custom_call.1} parent=1 // pred_check_branch
      %90 = sbr.rel (0) target = $region41
    $region40: #{tpu_custom_call.1} parent=1 // pred_region
      %s92 = ssub.s32 2048, 2048
      %93 = vsyncadd [#allocation12], %s92
      %s94 = sshll.u32 [#allocation11], 4
      %s95 = int_to_ptr.vmem [resolvable:$true] %s94
      %100 = dma.hbm_to_vmem [thread:$0]  %s9, 2048, %s95, [#allocation12], 128, 128, 8
    $region41: #{tpu_custom_call.1} parent=1 // pred_fallthru
      _
    // Predicated region
    $region42: #{tpu_custom_call.1} parent=1 // pred_check
      _
    $region43: #{tpu_custom_call.1} parent=1 // pred_check_branch
      %102 = sbr.rel (0) target = $region45
    $region44: #{tpu_custom_call.1} parent=1 // pred_region
      _
    $region45: #{tpu_custom_call.1} parent=1 // pred_fallthru
      _
    // Predicated region
    $region46: #{tpu_custom_call.1} parent=1 // pred_check
      _
    $region47: #{tpu_custom_call.1} parent=1 // pred_check_branch
      %104 = sbr.rel (0) target = $region49
    $region48: #{tpu_custom_call.1} parent=1 // pred_region
      %105 = dma.done [#allocation3], 256
    $region49: #{tpu_custom_call.1} parent=1 // pred_fallthru
      _
    // Predicated region
    $region50: #{tpu_custom_call.1} parent=1 // pred_check
      _
    $region51: #{tpu_custom_call.1} parent=1 // pred_check_branch
      %107 = sbr.rel (0) target = $region53
    $region52: #{tpu_custom_call.1} parent=1 // pred_region
      %108 = dma.done [#allocation6], 256
    $region53: #{tpu_custom_call.1} parent=1 // pred_fallthru
      _
    // Predicated region
    $region54: #{tpu_custom_call.1} parent=1 // pred_check
      _
    $region55: #{tpu_custom_call.1} parent=1 // pred_check_branch
      %110 = sbr.rel (0) target = $region57
    $region56: #{tpu_custom_call.1} parent=1 // pred_region
      %111 = dma.done [#allocation6], 2048
    $region57: #{tpu_custom_call.1} parent=1 // pred_fallthru
      _
    // Predicated region
    $region58: #{tpu_custom_call.1} parent=1 // pred_check
      _
    $region59: #{tpu_custom_call.1} parent=1 // pred_check_branch
      %113 = sbr.rel (0) target = $region61
    $region60: #{tpu_custom_call.1} parent=1 // pred_region
      %114 = dma.done [#allocation9], 2048
    $region61: #{tpu_custom_call.1} parent=1 // pred_fallthru
      _
    // Predicated region
    $region62: #{tpu_custom_call.1} parent=1 // pred_check
      _
    $region63: #{tpu_custom_call.1} parent=1 // pred_check_branch
      %116 = sbr.rel (0) target = $region65
    $region64: #{tpu_custom_call.1} parent=1 // pred_region
      %117 = dma.done [#allocation9], 2048
    $region65: #{tpu_custom_call.1} parent=1 // pred_fallthru
      _
    // Predicated region
    $region66: #{tpu_custom_call.1} parent=1 // pred_check
      _
    $region67: #{tpu_custom_call.1} parent=1 // pred_check_branch
      %119 = sbr.rel (0) target = $region69
    $region68: #{tpu_custom_call.1} parent=1 // pred_region
      %120 = dma.done [#allocation12], 2048
    $region69: #{tpu_custom_call.1} parent=1 // pred_fallthru
      _
    %v121 = vld [vmem:[#allocation2] sm:$0xff]
    %v122 = vld [vmem:[#allocation2 + $0x8] sm:$0xff]
    %v123 = vld [vmem:[#allocation5] sm:$0xff]
    %v124 = vld [vmem:[#allocation5 + $0x8] sm:$0xff]
    %v125 = vld [vmem:[%s2] sm:$0x1]
    %v127 = vlaneseq
    %v128 = vshrl.u32 %v127, 7
    %v129 = vsub.s32 0, %v128
    %v130 = vrot.slane %v125, %v129
    %vm132 = vcmask 130048
    %v134 = vsel %vm132, %v121, 0
    %v137 = vsel %vm132, %v122, 0
    %139 = vmatprep.subr.mxu0 0.0
    %140 = vmatpush1.msra.mxu0 %v123
    %141 = vmatprep.subr.mxu0 0.0
    %142 = vmatpush1.msra.mxu0 %v124
    %143 = vmatprep.subr.mxu0 0.0
    %144 = vmatpush1.msra.mxu0 0.0
    %145 = vmatprep.subr.mxu0 0.0
    %146 = vmatpush1.msra.mxu0 0.0
    %147 = vmatprep.subr.mxu0 0.0
    %148 = vmatpush1.msra.mxu0 0.0
    %149 = vmatprep.subr.mxu0 0.0
    %150 = vmatpush1.msra.mxu0 0.0
    %151 = vmatprep.subr.mxu0 0.0
    %152 = vmatpush1.msra.mxu0 0.0
    %153 = vmatprep.subr.mxu0 0.0
    %154 = vmatpush1.msra.mxu0 0.0
    %155 = vmatprep.subr.mxu0 0.0
    %156 = vmatpush1.msra.mxu0 0.0
    %157 = vmatprep.subr.mxu0 0.0
    %158 = vmatpush1.msra.mxu0 0.0
    %159 = vmatprep.subr.mxu0 0.0
    %160 = vmatpush1.msra.mxu0 0.0
    %161 = vmatprep.subr.mxu0 0.0
    %162 = vmatpush1.msra.mxu0 0.0
    %163 = vmatprep.subr.mxu0 0.0
    %164 = vmatpush1.msra.mxu0 0.0
    %165 = vmatprep.subr.mxu0 0.0
    %166 = vmatpush1.msra.mxu0 0.0
    %167 = vmatprep.subr.mxu0 0.0
    %168 = vmatpush1.msra.mxu0 0.0
    %169 = vmatprep.subr.mxu0 0.0
    %170 = vmatpush1.msra.mxu0 0.0
    %171 = vmatprep.subr.mxu0 0.0
    %172 = vmatpush1.msra.mxu0 0.0
    %173 = vmatprep.subr.mxu0 0.0
    %174 = vmatpush1.msra.mxu0 0.0
    %175 = vmatprep.subr.mxu0 0.0
    %176 = vmatpush1.msra.mxu0 0.0
    %177 = vmatprep.subr.mxu0 0.0
    %178 = vmatpush1.msra.mxu0 0.0
    %179 = vmatprep.subr.mxu0 0.0
    %180 = vmatpush1.msra.mxu0 0.0
    %181 = vmatprep.subr.mxu0 0.0
    %182 = vmatpush1.msra.mxu0 0.0
    %183 = vmatprep.subr.mxu0 0.0
    %184 = vmatpush1.msra.mxu0 0.0
    %185 = vmatprep.subr.mxu0 0.0
    %186 = vmatpush1.msra.mxu0 0.0
    %187 = vmatprep.subr.mxu0 0.0
    %188 = vmatpush1.msra.mxu0 0.0
    %189 = vmatprep.subr.mxu0 0.0
    %190 = vmatpush1.msra.mxu0 0.0
    %191 = vmatprep.subr.mxu0 0.0
    %192 = vmatpush1.msra.mxu0 0.0
    %193 = vmatprep.subr.mxu0 0.0
    %194 = vmatpush1.msra.mxu0 0.0
    %195 = vmatprep.subr.mxu0 0.0
    %196 = vmatpush1.msra.mxu0 0.0
    %197 = vmatprep.subr.mxu0 0.0
    %198 = vmatpush1.msra.mxu0 0.0
    %199 = vmatprep.subr.mxu0 0.0
    %200 = vmatpush1.msra.mxu0 0.0
    %201 = vmatprep.subr.mxu0 0.0
    %202 = vmatpush1.msra.mxu0 0.0
    %203 = vmatprep.mubr.f32.mxu0 0.0
    %204 = vmatmul.mubr.f32.gmra.mrb[0].mxu0 %v134
    %v205 = vpop.f32.mrb[0].mxu0
    %v206 = vadd.f32 %v130, %v205
    %v207 = vpop.f32.mrb[0].mxu0
    %208 = vmatprep.mubr.f32.mxu0 0.0
    %209 = vmatmul.mubr.f32.gmra.mrb[0].mxu0 %v137
    %v210 = vpop.f32.mrb[0].mxu0
    %v211 = vadd.f32 %v130, %v210
    %v212 = vpop.f32.mrb[0].mxu0
    %213 = vdwg.mxu0
    %v214 = vmul.f32 %v206, 0.01
    %v215 = vmul.f32 %v211, 0.01
    %v216 = vmax.f32 %v206, %v214
    %v217 = vmax.f32 %v211, %v215
    %v218 = vld [vmem:[#allocation7] sm:$0xff]
    %v219 = vld [vmem:[#allocation7 + $0x8] sm:$0xff]
    %v220 = vld [vmem:[#allocation7 + $0x10] sm:$0xff]
    %v221 = vld [vmem:[#allocation7 + $0x18] sm:$0xff]
    %v222 = vld [vmem:[#allocation7 + $0x20] sm:$0xff]
    %v223 = vld [vmem:[#allocation7 + $0x28] sm:$0xff]
    %v224 = vld [vmem:[#allocation7 + $0x30] sm:$0xff]
    %v225 = vld [vmem:[#allocation7 + $0x38] sm:$0xff]
    %v226 = vld [vmem:[#allocation7 + $0x40] sm:$0xff]
    %v227 = vld [vmem:[#allocation7 + $0x48] sm:$0xff]
    %v228 = vld [vmem:[#allocation7 + $0x50] sm:$0xff]
    %v229 = vld [vmem:[#allocation7 + $0x58] sm:$0xff]
    %v230 = vld [vmem:[#allocation7 + $0x60] sm:$0xff]
    %v231 = vld [vmem:[#allocation7 + $0x68] sm:$0xff]
    %v232 = vld [vmem:[#allocation7 + $0x70] sm:$0xff]
    %v233 = vld [vmem:[#allocation7 + $0x78] sm:$0xff]
    %v234 = vld [vmem:[%s4] sm:$0x1]
    %v236 = vlaneseq
    %v237 = vshrl.u32 %v236, 7
    %v238 = vsub.s32 0, %v237
    %v239 = vrot.slane %v234, %v238
    %241 = vmatprep.subr.mxu0 0.0
    %242 = vmatpush1.msra.mxu0 %v218
    %243 = vmatprep.subr.mxu0 0.0
    %244 = vmatpush1.msra.mxu0 %v219
    %245 = vmatprep.subr.mxu0 0.0
    %246 = vmatpush1.msra.mxu0 %v220
    %247 = vmatprep.subr.mxu0 0.0
    %248 = vmatpush1.msra.mxu0 %v221
    %249 = vmatprep.subr.mxu0 0.0
    %250 = vmatpush1.msra.mxu0 %v222
    %251 = vmatprep.subr.mxu0 0.0
    %252 = vmatpush1.msra.mxu0 %v223
    %253 = vmatprep.subr.mxu0 0.0
    %254 = vmatpush1.msra.mxu0 %v224
    %255 = vmatprep.subr.mxu0 0.0
    %256 = vmatpush1.msra.mxu0 %v225
    %257 = vmatprep.subr.mxu0 0.0
    %258 = vmatpush1.msra.mxu0 %v226
    %259 = vmatprep.subr.mxu0 0.0
    %260 = vmatpush1.msra.mxu0 %v227
    %261 = vmatprep.subr.mxu0 0.0
    %262 = vmatpush1.msra.mxu0 %v228
    %263 = vmatprep.subr.mxu0 0.0
    %264 = vmatpush1.msra.mxu0 %v229
    %265 = vmatprep.subr.mxu0 0.0
    %266 = vmatpush1.msra.mxu0 %v230
    %267 = vmatprep.subr.mxu0 0.0
    %268 = vmatpush1.msra.mxu0 %v231
    %269 = vmatprep.subr.mxu0 0.0
    %270 = vmatpush1.msra.mxu0 %v232
    %271 = vmatprep.subr.mxu0 0.0
    %272 = vmatpush1.msra.mxu0 %v233
    %273 = vmatprep.subr.mxu0 0.0
    %274 = vmatpush1.msra.mxu0 0.0
    %275 = vmatprep.subr.mxu0 0.0
    %276 = vmatpush1.msra.mxu0 0.0
    %277 = vmatprep.subr.mxu0 0.0
    %278 = vmatpush1.msra.mxu0 0.0
    %279 = vmatprep.subr.mxu0 0.0
    %280 = vmatpush1.msra.mxu0 0.0
    %281 = vmatprep.subr.mxu0 0.0
    %282 = vmatpush1.msra.mxu0 0.0
    %283 = vmatprep.subr.mxu0 0.0
    %284 = vmatpush1.msra.mxu0 0.0
    %285 = vmatprep.subr.mxu0 0.0
    %286 = vmatpush1.msra.mxu0 0.0
    %287 = vmatprep.subr.mxu0 0.0
    %288 = vmatpush1.msra.mxu0 0.0
    %289 = vmatprep.subr.mxu0 0.0
    %290 = vmatpush1.msra.mxu0 0.0
    %291 = vmatprep.subr.mxu0 0.0
    %292 = vmatpush1.msra.mxu0 0.0
    %293 = vmatprep.subr.mxu0 0.0
    %294 = vmatpush1.msra.mxu0 0.0
    %295 = vmatprep.subr.mxu0 0.0
    %296 = vmatpush1.msra.mxu0 0.0
    %297 = vmatprep.subr.mxu0 0.0
    %298 = vmatpush1.msra.mxu0 0.0
    %299 = vmatprep.subr.mxu0 0.0
    %300 = vmatpush1.msra.mxu0 0.0
    %301 = vmatprep.subr.mxu0 0.0
    %302 = vmatpush1.msra.mxu0 0.0
    %303 = vmatprep.subr.mxu0 0.0
    %304 = vmatpush1.msra.mxu0 0.0
    %305 = vmatprep.mubr.f32.mxu0 0.0
    %306 = vmatmul.mubr.f32.gmra.mrb[0].mxu0 %v216
    %v307 = vpop.f32.mrb[0].mxu0
    %v308 = vadd.f32 %v239, %v307
    %v309 = vpop.f32.mrb[0].mxu0
    %310 = vmatprep.mubr.f32.mxu0 0.0
    %311 = vmatmul.mubr.f32.gmra.mrb[0].mxu0 %v217
    %v312 = vpop.f32.mrb[0].mxu0
    %v313 = vadd.f32 %v239, %v312
    %v314 = vpop.f32.mrb[0].mxu0
    %315 = vdwg.mxu0
    %v316 = vmul.f32 %v308, 0.01
    %v317 = vmul.f32 %v313, 0.01
    %v318 = vmax.f32 %v308, %v316
    %v319 = vmax.f32 %v313, %v317
    %v320 = vld [vmem:[#allocation8] sm:$0xff]
    %v321 = vld [vmem:[#allocation8 + $0x8] sm:$0xff]
    %v322 = vld [vmem:[#allocation8 + $0x10] sm:$0xff]
    %v323 = vld [vmem:[#allocation8 + $0x18] sm:$0xff]
    %v324 = vld [vmem:[#allocation8 + $0x20] sm:$0xff]
    %v325 = vld [vmem:[#allocation8 + $0x28] sm:$0xff]
    %v326 = vld [vmem:[#allocation8 + $0x30] sm:$0xff]
    %v327 = vld [vmem:[#allocation8 + $0x38] sm:$0xff]
    %v328 = vld [vmem:[#allocation8 + $0x40] sm:$0xff]
    %v329 = vld [vmem:[#allocation8 + $0x48] sm:$0xff]
    %v330 = vld [vmem:[#allocation8 + $0x50] sm:$0xff]
    %v331 = vld [vmem:[#allocation8 + $0x58] sm:$0xff]
    %v332 = vld [vmem:[#allocation8 + $0x60] sm:$0xff]
    %v333 = vld [vmem:[#allocation8 + $0x68] sm:$0xff]
    %v334 = vld [vmem:[#allocation8 + $0x70] sm:$0xff]
    %v335 = vld [vmem:[#allocation8 + $0x78] sm:$0xff]
    %v336 = vld [vmem:[%s6] sm:$0x1]
    %v338 = vlaneseq
    %v339 = vshrl.u32 %v338, 7
    %v340 = vsub.s32 0, %v339
    %v341 = vrot.slane %v336, %v340
    %343 = vmatprep.subr.mxu0 0.0
    %344 = vmatpush1.msra.mxu0 %v320
    %345 = vmatprep.subr.mxu0 0.0
    %346 = vmatpush1.msra.mxu0 %v321
    %347 = vmatprep.subr.mxu0 0.0
    %348 = vmatpush1.msra.mxu0 %v322
    %349 = vmatprep.subr.mxu0 0.0
    %350 = vmatpush1.msra.mxu0 %v323
    %351 = vmatprep.subr.mxu0 0.0
    %352 = vmatpush1.msra.mxu0 %v324
    %353 = vmatprep.subr.mxu0 0.0
    %354 = vmatpush1.msra.mxu0 %v325
    %355 = vmatprep.subr.mxu0 0.0
    %356 = vmatpush1.msra.mxu0 %v326
    %357 = vmatprep.subr.mxu0 0.0
    %358 = vmatpush1.msra.mxu0 %v327
    %359 = vmatprep.subr.mxu0 0.0
    %360 = vmatpush1.msra.mxu0 %v328
    %361 = vmatprep.subr.mxu0 0.0
    %362 = vmatpush1.msra.mxu0 %v329
    %363 = vmatprep.subr.mxu0 0.0
    %364 = vmatpush1.msra.mxu0 %v330
    %365 = vmatprep.subr.mxu0 0.0
    %366 = vmatpush1.msra.mxu0 %v331
    %367 = vmatprep.subr.mxu0 0.0
    %368 = vmatpush1.msra.mxu0 %v332
    %369 = vmatprep.subr.mxu0 0.0
    %370 = vmatpush1.msra.mxu0 %v333
    %371 = vmatprep.subr.mxu0 0.0
    %372 = vmatpush1.msra.mxu0 %v334
    %373 = vmatprep.subr.mxu0 0.0
    %374 = vmatpush1.msra.mxu0 %v335
    %375 = vmatprep.subr.mxu0 0.0
    %376 = vmatpush1.msra.mxu0 0.0
    %377 = vmatprep.subr.mxu0 0.0
    %378 = vmatpush1.msra.mxu0 0.0
    %379 = vmatprep.subr.mxu0 0.0
    %380 = vmatpush1.msra.mxu0 0.0
    %381 = vmatprep.subr.mxu0 0.0
    %382 = vmatpush1.msra.mxu0 0.0
    %383 = vmatprep.subr.mxu0 0.0
    %384 = vmatpush1.msra.mxu0 0.0
    %385 = vmatprep.subr.mxu0 0.0
    %386 = vmatpush1.msra.mxu0 0.0
    %387 = vmatprep.subr.mxu0 0.0
    %388 = vmatpush1.msra.mxu0 0.0
    %389 = vmatprep.subr.mxu0 0.0
    %390 = vmatpush1.msra.mxu0 0.0
    %391 = vmatprep.subr.mxu0 0.0
    %392 = vmatpush1.msra.mxu0 0.0
    %393 = vmatprep.subr.mxu0 0.0
    %394 = vmatpush1.msra.mxu0 0.0
    %395 = vmatprep.subr.mxu0 0.0
    %396 = vmatpush1.msra.mxu0 0.0
    %397 = vmatprep.subr.mxu0 0.0
    %398 = vmatpush1.msra.mxu0 0.0
    %399 = vmatprep.subr.mxu0 0.0
    %400 = vmatpush1.msra.mxu0 0.0
    %401 = vmatprep.subr.mxu0 0.0
    %402 = vmatpush1.msra.mxu0 0.0
    %403 = vmatprep.subr.mxu0 0.0
    %404 = vmatpush1.msra.mxu0 0.0
    %405 = vmatprep.subr.mxu0 0.0
    %406 = vmatpush1.msra.mxu0 0.0
    %407 = vmatprep.mubr.f32.mxu0 0.0
    %408 = vmatmul.mubr.f32.gmra.mrb[0].mxu0 %v318
    %v409 = vpop.f32.mrb[0].mxu0
    %v410 = vadd.f32 %v341, %v409
    %v411 = vpop.f32.mrb[0].mxu0
    %412 = vmatprep.mubr.f32.mxu0 0.0
    %413 = vmatmul.mubr.f32.gmra.mrb[0].mxu0 %v319
    %v414 = vpop.f32.mrb[0].mxu0
    %v415 = vadd.f32 %v341, %v414
    %v416 = vpop.f32.mrb[0].mxu0
    %417 = vdwg.mxu0
    %v418 = vmul.f32 %v410, 0.01
    %v419 = vmul.f32 %v415, 0.01
    %v420 = vmax.f32 %v410, %v418
    %v421 = vmax.f32 %v415, %v419
    %v422 = vld [vmem:[#allocation10] sm:$0xff]
    %v423 = vld [vmem:[#allocation10 + $0x8] sm:$0xff]
    %v424 = vld [vmem:[#allocation10 + $0x10] sm:$0xff]
    %v425 = vld [vmem:[#allocation10 + $0x18] sm:$0xff]
    %v426 = vld [vmem:[#allocation10 + $0x20] sm:$0xff]
    %v427 = vld [vmem:[#allocation10 + $0x28] sm:$0xff]
    %v428 = vld [vmem:[#allocation10 + $0x30] sm:$0xff]
    %v429 = vld [vmem:[#allocation10 + $0x38] sm:$0xff]
    %v430 = vld [vmem:[#allocation10 + $0x40] sm:$0xff]
    %v431 = vld [vmem:[#allocation10 + $0x48] sm:$0xff]
    %v432 = vld [vmem:[#allocation10 + $0x50] sm:$0xff]
    %v433 = vld [vmem:[#allocation10 + $0x58] sm:$0xff]
    %v434 = vld [vmem:[#allocation10 + $0x60] sm:$0xff]
    %v435 = vld [vmem:[#allocation10 + $0x68] sm:$0xff]
    %v436 = vld [vmem:[#allocation10 + $0x70] sm:$0xff]
    %v437 = vld [vmem:[#allocation10 + $0x78] sm:$0xff]
    %v438 = vld [vmem:[%s8] sm:$0x1]
    %v440 = vlaneseq
    %v441 = vshrl.u32 %v440, 7
    %v442 = vsub.s32 0, %v441
    %v443 = vrot.slane %v438, %v442
    %445 = vmatprep.subr.mxu0 0.0
    %446 = vmatpush1.msra.mxu0 %v422
    %447 = vmatprep.subr.mxu0 0.0
    %448 = vmatpush1.msra.mxu0 %v423
    %449 = vmatprep.subr.mxu0 0.0
    %450 = vmatpush1.msra.mxu0 %v424
    %451 = vmatprep.subr.mxu0 0.0
    %452 = vmatpush1.msra.mxu0 %v425
    %453 = vmatprep.subr.mxu0 0.0
    %454 = vmatpush1.msra.mxu0 %v426
    %455 = vmatprep.subr.mxu0 0.0
    %456 = vmatpush1.msra.mxu0 %v427
    %457 = vmatprep.subr.mxu0 0.0
    %458 = vmatpush1.msra.mxu0 %v428
    %459 = vmatprep.subr.mxu0 0.0
    %460 = vmatpush1.msra.mxu0 %v429
    %461 = vmatprep.subr.mxu0 0.0
    %462 = vmatpush1.msra.mxu0 %v430
    %463 = vmatprep.subr.mxu0 0.0
    %464 = vmatpush1.msra.mxu0 %v431
    %465 = vmatprep.subr.mxu0 0.0
    %466 = vmatpush1.msra.mxu0 %v432
    %467 = vmatprep.subr.mxu0 0.0
    %468 = vmatpush1.msra.mxu0 %v433
    %469 = vmatprep.subr.mxu0 0.0
    %470 = vmatpush1.msra.mxu0 %v434
    %471 = vmatprep.subr.mxu0 0.0
    %472 = vmatpush1.msra.mxu0 %v435
    %473 = vmatprep.subr.mxu0 0.0
    %474 = vmatpush1.msra.mxu0 %v436
    %475 = vmatprep.subr.mxu0 0.0
    %476 = vmatpush1.msra.mxu0 %v437
    %477 = vmatprep.subr.mxu0 0.0
    %478 = vmatpush1.msra.mxu0 0.0
    %479 = vmatprep.subr.mxu0 0.0
    %480 = vmatpush1.msra.mxu0 0.0
    %481 = vmatprep.subr.mxu0 0.0
    %482 = vmatpush1.msra.mxu0 0.0
    %483 = vmatprep.subr.mxu0 0.0
    %484 = vmatpush1.msra.mxu0 0.0
    %485 = vmatprep.subr.mxu0 0.0
    %486 = vmatpush1.msra.mxu0 0.0
    %487 = vmatprep.subr.mxu0 0.0
    %488 = vmatpush1.msra.mxu0 0.0
    %489 = vmatprep.subr.mxu0 0.0
    %490 = vmatpush1.msra.mxu0 0.0
    %491 = vmatprep.subr.mxu0 0.0
    %492 = vmatpush1.msra.mxu0 0.0
    %493 = vmatprep.subr.mxu0 0.0
    %494 = vmatpush1.msra.mxu0 0.0
    %495 = vmatprep.subr.mxu0 0.0
    %496 = vmatpush1.msra.mxu0 0.0
    %497 = vmatprep.subr.mxu0 0.0
    %498 = vmatpush1.msra.mxu0 0.0
    %499 = vmatprep.subr.mxu0 0.0
    %500 = vmatpush1.msra.mxu0 0.0
    %501 = vmatprep.subr.mxu0 0.0
    %502 = vmatpush1.msra.mxu0 0.0
    %503 = vmatprep.subr.mxu0 0.0
    %504 = vmatpush1.msra.mxu0 0.0
    %505 = vmatprep.subr.mxu0 0.0
    %506 = vmatpush1.msra.mxu0 0.0
    %507 = vmatprep.subr.mxu0 0.0
    %508 = vmatpush1.msra.mxu0 0.0
    %509 = vmatprep.mubr.f32.mxu0 0.0
    %510 = vmatmul.mubr.f32.gmra.mrb[0].mxu0 %v420
    %v511 = vpop.f32.mrb[0].mxu0
    %v512 = vadd.f32 %v443, %v511
    %v513 = vpop.f32.mrb[0].mxu0
    %514 = vmatprep.mubr.f32.mxu0 0.0
    %515 = vmatmul.mubr.f32.gmra.mrb[0].mxu0 %v421
    %v516 = vpop.f32.mrb[0].mxu0
    %v517 = vadd.f32 %v443, %v516
    %v518 = vpop.f32.mrb[0].mxu0
    %519 = vdwg.mxu0
    %v520 = vmul.f32 %v512, 0.01
    %v521 = vmul.f32 %v517, 0.01
    %v522 = vmax.f32 %v512, %v520
    %v523 = vmax.f32 %v517, %v521
    %v524 = vld [vmem:[#allocation11] sm:$0xff]
    %v525 = vld [vmem:[#allocation11 + $0x8] sm:$0xff]
    %v526 = vld [vmem:[#allocation11 + $0x10] sm:$0xff]
    %v527 = vld [vmem:[#allocation11 + $0x18] sm:$0xff]
    %v528 = vld [vmem:[#allocation11 + $0x20] sm:$0xff]
    %v529 = vld [vmem:[#allocation11 + $0x28] sm:$0xff]
    %v530 = vld [vmem:[#allocation11 + $0x30] sm:$0xff]
    %v531 = vld [vmem:[#allocation11 + $0x38] sm:$0xff]
    %v532 = vld [vmem:[#allocation11 + $0x40] sm:$0xff]
    %v533 = vld [vmem:[#allocation11 + $0x48] sm:$0xff]
    %v534 = vld [vmem:[#allocation11 + $0x50] sm:$0xff]
    %v535 = vld [vmem:[#allocation11 + $0x58] sm:$0xff]
    %v536 = vld [vmem:[#allocation11 + $0x60] sm:$0xff]
    %v537 = vld [vmem:[#allocation11 + $0x68] sm:$0xff]
    %v538 = vld [vmem:[#allocation11 + $0x70] sm:$0xff]
    %v539 = vld [vmem:[#allocation11 + $0x78] sm:$0xff]
    %v540 = vld [vmem:[%s10] sm:$0x1]
    %v542 = vlaneseq
    %v543 = vshrl.u32 %v542, 7
    %v544 = vsub.s32 0, %v543
    %v545 = vrot.slane %v540, %v544
    %547 = vmatprep.subr.mxu0 0.0
    %548 = vmatpush1.msra.mxu0 %v524
    %549 = vmatprep.subr.mxu0 0.0
    %550 = vmatpush1.msra.mxu0 %v525
    %551 = vmatprep.subr.mxu0 0.0
    %552 = vmatpush1.msra.mxu0 %v526
    %553 = vmatprep.subr.mxu0 0.0
    %554 = vmatpush1.msra.mxu0 %v527
    %555 = vmatprep.subr.mxu0 0.0
    %556 = vmatpush1.msra.mxu0 %v528
    %557 = vmatprep.subr.mxu0 0.0
    %558 = vmatpush1.msra.mxu0 %v529
    %559 = vmatprep.subr.mxu0 0.0
    %560 = vmatpush1.msra.mxu0 %v530
    %561 = vmatprep.subr.mxu0 0.0
    %562 = vmatpush1.msra.mxu0 %v531
    %563 = vmatprep.subr.mxu0 0.0
    %564 = vmatpush1.msra.mxu0 %v532
    %565 = vmatprep.subr.mxu0 0.0
    %566 = vmatpush1.msra.mxu0 %v533
    %567 = vmatprep.subr.mxu0 0.0
    %568 = vmatpush1.msra.mxu0 %v534
    %569 = vmatprep.subr.mxu0 0.0
    %570 = vmatpush1.msra.mxu0 %v535
    %571 = vmatprep.subr.mxu0 0.0
    %572 = vmatpush1.msra.mxu0 %v536
    %573 = vmatprep.subr.mxu0 0.0
    %574 = vmatpush1.msra.mxu0 %v537
    %575 = vmatprep.subr.mxu0 0.0
    %576 = vmatpush1.msra.mxu0 %v538
    %577 = vmatprep.subr.mxu0 0.0
    %578 = vmatpush1.msra.mxu0 %v539
    %579 = vmatprep.subr.mxu0 0.0
    %580 = vmatpush1.msra.mxu0 0.0
    %581 = vmatprep.subr.mxu0 0.0
    %582 = vmatpush1.msra.mxu0 0.0
    %583 = vmatprep.subr.mxu0 0.0
    %584 = vmatpush1.msra.mxu0 0.0
    %585 = vmatprep.subr.mxu0 0.0
    %586 = vmatpush1.msra.mxu0 0.0
    %587 = vmatprep.subr.mxu0 0.0
    %588 = vmatpush1.msra.mxu0 0.0
    %589 = vmatprep.subr.mxu0 0.0
    %590 = vmatpush1.msra.mxu0 0.0
    %591 = vmatprep.subr.mxu0 0.0
    %592 = vmatpush1.msra.mxu0 0.0
    %593 = vmatprep.subr.mxu0 0.0
    %594 = vmatpush1.msra.mxu0 0.0
    %595 = vmatprep.subr.mxu0 0.0
    %596 = vmatpush1.msra.mxu0 0.0
    %597 = vmatprep.subr.mxu0 0.0
    %598 = vmatpush1.msra.mxu0 0.0
    %599 = vmatprep.subr.mxu0 0.0
    %600 = vmatpush1.msra.mxu0 0.0
    %601 = vmatprep.subr.mxu0 0.0
    %602 = vmatpush1.msra.mxu0 0.0
    %603 = vmatprep.subr.mxu0 0.0
    %604 = vmatpush1.msra.mxu0 0.0
    %605 = vmatprep.subr.mxu0 0.0
    %606 = vmatpush1.msra.mxu0 0.0
    %607 = vmatprep.subr.mxu0 0.0
    %608 = vmatpush1.msra.mxu0 0.0
    %609 = vmatprep.subr.mxu0 0.0
    %610 = vmatpush1.msra.mxu0 0.0
    %611 = vmatprep.mubr.f32.mxu0 0.0
    %612 = vmatmul.mubr.f32.gmra.mrb[0].mxu0 %v522
    %v613 = vpop.f32.mrb[0].mxu0
    %v614 = vadd.f32 %v545, %v613
    %v615 = vpop.f32.mrb[0].mxu0
    %616 = vmatprep.mubr.f32.mxu0 0.0
    %617 = vmatmul.mubr.f32.gmra.mrb[0].mxu0 %v523
    %v618 = vpop.f32.mrb[0].mxu0
    %v619 = vadd.f32 %v545, %v618
    %v620 = vpop.f32.mrb[0].mxu0
    %621 = vdwg.mxu0
    %622 = vst [vmem:[#allocation13] sm:$0xff] %v614
    %623 = vst [vmem:[#allocation13 + $0x8] sm:$0xff] %v619
    // Predicated region
    $region70: #{tpu_custom_call.1} parent=1 // pred_check
      _
    $region71: #{tpu_custom_call.1} parent=1 // pred_check_branch
      %625 = sbr.rel (0) target = $region73
    $region72: #{tpu_custom_call.1} parent=1 // pred_region
      %s627 = ssub.s32 256, 256
      %628 = vsyncadd [#allocation4], %s627
      %s629 = sshll.u32 [#allocation13], 4
      %s630 = int_to_ptr.vmem [resolvable:$true] %s629
      %635 = dma.vmem_to_hbm [thread:$0]  %s630, 256, %s11, [#allocation4], 128, 128, 8
    $region73: #{tpu_custom_call.1} parent=1 // pred_fallthru
      _
    // Predicated region
    $region74: #{tpu_custom_call.1} parent=1 // pred_check
      _
    $region75: #{tpu_custom_call.1} parent=1 // pred_check_branch
      %637 = sbr.rel (0) target = $region77
    $region76: #{tpu_custom_call.1} parent=1 // pred_region
      %638 = dma.done [#allocation4], 256
    $region77: #{tpu_custom_call.1} parent=1 // pred_fallthru
      _
    %639 = vsyncpa [#allocation3], 1
    %640 = vsyncpa [#allocation6], 1
    %641 = vsyncpa [#allocation9], 1
    %642 = vsyncpa [#allocation12], 1
    %643 = vsyncpa [#allocation4], 1

// kernel: tpu_custom_call.1
$region0: #{tpu_custom_call.1}
  #allocation0 [shape = 'u32[]', space=smem, size = 0x4, offset = 0x4, fixed_abs, tag = 'smem constant byte address 0x4 - core index']
  #allocation1 [shape = 'u32[144,128]{1,0:T(1,128)}', space=vmem, size = 0x12000, scoped, tag = 'internal scratch']
  %s0 = inlined_call_operand.hbm [shape: f32[16,16], index: 0, kind: input, shape index: {}]
  %s1 = inlined_call_operand.hbm [shape: f32[16,128], index: 1, kind: input, shape index: {}]
  %s2 = inlined_call_operand.vmem [shape: f32[1,128], index: 2, kind: input, shape index: {}]
  %s3 = inlined_call_operand.hbm [shape: f32[128,128], index: 3, kind: input, shape index: {}]
  %s4 = inlined_call_operand.vmem [shape: f32[1,128], index: 4, kind: input, shape index: {}]
  %s5 = inlined_call_operand.hbm [shape: f32[128,128], index: 5, kind: input, shape index: {}]
  %s6 = inlined_call_operand.vmem [shape: f32[1,128], index: 6, kind: input, shape index: {}]
  %s7 = inlined_call_operand.hbm [shape: f32[128,128], index: 7, kind: input, shape index: {}]
  %s8 = inlined_call_operand.vmem [shape: f32[1,128], index: 8, kind: input, shape index: {}]
  %s9 = inlined_call_operand.hbm [shape: f32[128,128], index: 9, kind: input, shape index: {}]
  %s10 = inlined_call_operand.vmem [shape: f32[1,128], index: 10, kind: input, shape index: {}]
  %s11 = inlined_call_operand.hbm [shape: f32[16,128], index: 11, kind: output, shape index: {}]
  %s12 = sld [smem:[#allocation0]]
  $region78: #{tpu_custom_call.1} parent=0
    _
  %s14 = ssub.s32 1, %s12
  %s15 = scalar_select 0, %s14, %s12
  $region1: #{tpu_custom_call.1} parent=0
    #allocation2 [shape = 'u8[8192]{0}', space=vmem, size = 0x2000, scoped, tag = 'input window, operand 0, single buffered']
    #allocation3 [shape = 's32[1]{0}', space=sflag, size = 0x4, scoped, tag = 'scoped memory for tpu_custom_call.1']
    #allocation4 [shape = 's32[1]{0}', space=sflag, size = 0x4, scoped, tag = 'scoped memory for tpu_custom_call.1']
    #allocation5 [shape = 'u8[8192]{0}', space=vmem, size = 0x2000, scoped, tag = 'input window, operand 1, single buffered']
    #allocation6 [shape = 's32[1]{0}', space=sflag, size = 0x4, scoped, tag = 'scoped memory for tpu_custom_call.1']
    #allocation7 [shape = 'u8[65536]{0}', space=vmem, size = 0x10000, scoped, tag = 'input window, operand 3, single buffered']
    #allocation8 [shape = 'u8[65536]{0}', space=vmem, size = 0x10000, scoped, tag = 'input window, operand 5, single buffered']
    #allocation9 [shape = 's32[1]{0}', space=sflag, size = 0x4, scoped, tag = 'scoped memory for tpu_custom_call.1']
    #allocation10 [shape = 'u8[65536]{0}', space=vmem, size = 0x10000, scoped, tag = 'input window, operand 7, single buffered']
    #allocation11 [shape = 'u8[65536]{0}', space=vmem, size = 0x10000, scoped, tag = 'input window, operand 9, single buffered']
    #allocation12 [shape = 's32[1]{0}', space=sflag, size = 0x4, scoped, tag = 'scoped memory for tpu_custom_call.1']
    #allocation13 [shape = 'u8[8192]{0}', space=vmem, size = 0x2000, scoped, tag = 'output window, operand 0, single buffered']
    %16 = vsyncpa [#allocation3], 0
    %17 = vsyncpa [#allocation6], 0
    %18 = vsyncpa [#allocation9], 0
    %19 = vsyncpa [#allocation12], 0
    %20 = vsyncpa [#allocation4], 0
    // Predicated region
    $region2: #{tpu_custom_call.1} parent=1 // pred_check
      _
    $region3: #{tpu_custom_call.1} parent=1 // pred_check_branch
      %22 = sbr.rel (0) target = $region5
    $region4: #{tpu_custom_call.1} parent=1 // pred_region
      %s24 = ssub.s32 256, 256
      %25 = vsyncadd [#allocation3], %s24
      %s26 = sshll.u32 [#allocation2], 4
      %s27 = int_to_ptr.vmem [resolvable:$true] %s26
      %32 = dma.hbm_to_vmem [thread:$0]  %s0, 256, %s27, [#allocation3], 128, 128, 8
    $region5: #{tpu_custom_call.1} parent=1 // pred_fallthru
      _
    // Predicated region
    $region6: #{tpu_custom_call.1} parent=1 // pred_check
      _
    $region7: #{tpu_custom_call.1} parent=1 // pred_check_branch
      %34 = sbr.rel (0) target = $region9
    $region8: #{tpu_custom_call.1} parent=1 // pred_region
      %s36 = ssub.s32 256, 256
      %37 = vsyncadd [#allocation6], %s36
      %s38 = sshll.u32 [#allocation5], 4
      %s39 = int_to_ptr.vmem [resolvable:$true] %s38
      %44 = dma.hbm_to_vmem [thread:$0]  %s1, 256, %s39, [#allocation6], 128, 128, 8
    $region9: #{tpu_custom_call.1} parent=1 // pred_fallthru
      _
    // Predicated region
    $region10: #{tpu_custom_call.1} parent=1 // pred_check
      _
    $region11: #{tpu_custom_call.1} parent=1 // pred_check_branch
      %46 = sbr.rel (0) target = $region13
    $region12: #{tpu_custom_call.1} parent=1 // pred_region
      _
    $region13: #{tpu_custom_call.1} parent=1 // pred_fallthru
      _
    // Predicated region
    $region14: #{tpu_custom_call.1} parent=1 // pred_check
      _
    $region15: #{tpu_custom_call.1} parent=1 // pred_check_branch
      %48 = sbr.rel (0) target = $region17
    $region16: #{tpu_custom_call.1} parent=1 // pred_region
      %s50 = ssub.s32 2048, 2048
      %51 = vsyncadd [#allocation6], %s50
      %s52 = sshll.u32 [#allocation7], 4
      %s53 = int_to_ptr.vmem [resolvable:$true] %s52
      %58 = dma.hbm_to_vmem [thread:$0]  %s3, 2048, %s53, [#allocation6], 128, 128, 8
    $region17: #{tpu_custom_call.1} parent=1 // pred_fallthru
      _
    // Predicated region
    $region18: #{tpu_custom_call.1} parent=1 // pred_check
      _
    $region19: #{tpu_custom_call.1} parent=1 // pred_check_branch
      %60 = sbr.rel (0) target = $region21
    $region20: #{tpu_custom_call.1} parent=1 // pred_region
      _
    $region21: #{tpu_custom_call.1} parent=1 // pred_fallthru
      _
    // Predicated region
    $region22: #{tpu_custom_call.1} parent=1 // pred_check
      _
    $region23: #{tpu_custom_call.1} parent=1 // pred_check_branch
      %62 = sbr.rel (0) target = $region25
    $region24: #{tpu_custom_call.1} parent=1 // pred_region
      %s64 = ssub.s32 2048, 2048
      %65 = vsyncadd [#allocation9], %s64
      %s66 = sshll.u32 [#allocation8], 4
      %s67 = int_to_ptr.vmem [resolvable:$true] %s66
      %72 = dma.hbm_to_vmem [thread:$0]  %s5, 2048, %s67, [#allocation9], 128, 128, 8
    $region25: #{tpu_custom_call.1} parent=1 // pred_fallthru
      _
    // Predicated region
    $region26: #{tpu_custom_call.1} parent=1 // pred_check
      _
    $region27: #{tpu_custom_call.1} parent=1 // pred_check_branch
      %74 = sbr.rel (0) target = $region29
    $region28: #{tpu_custom_call.1} parent=1 // pred_region
      _
    $region29: #{tpu_custom_call.1} parent=1 // pred_fallthru
      _
    // Predicated region
    $region30: #{tpu_custom_call.1} parent=1 // pred_check
      _
    $region31: #{tpu_custom_call.1} parent=1 // pred_check_branch
      %76 = sbr.rel (0) target = $region33
    $region32: #{tpu_custom_call.1} parent=1 // pred_region
      %s78 = ssub.s32 2048, 2048
      %79 = vsyncadd [#allocation9], %s78
      %s80 = sshll.u32 [#allocation10], 4
      %s81 = int_to_ptr.vmem [resolvable:$true] %s80
      %86 = dma.hbm_to_vmem [thread:$0]  %s7, 2048, %s81, [#allocation9], 128, 128, 8
    $region33: #{tpu_custom_call.1} parent=1 // pred_fallthru
      _
    // Predicated region
    $region34: #{tpu_custom_call.1} parent=1 // pred_check
      _
    $region35: #{tpu_custom_call.1} parent=1 // pred_check_branch
      %88 = sbr.rel (0) target = $region37
    $region36: #{tpu_custom_call.1} parent=1 // pred_region
      _
    $region37: #{tpu_custom_call.1} parent=1 // pred_fallthru
      _
    // Predicated region
    $region38: #{tpu_custom_call.1} parent=1 // pred_check
      _
    $region39: #{tpu_custom_call.1} parent=1 // pred_check_branch
      %90 = sbr.rel (0) target = $region41
    $region40: #{tpu_custom_call.1} parent=1 // pred_region
      %s92 = ssub.s32 2048, 2048
      %93 = vsyncadd [#allocation12], %s92
      %s94 = sshll.u32 [#allocation11], 4
      %s95 = int_to_ptr.vmem [resolvable:$true] %s94
      %100 = dma.hbm_to_vmem [thread:$0]  %s9, 2048, %s95, [#allocation12], 128, 128, 8
    $region41: #{tpu_custom_call.1} parent=1 // pred_fallthru
      _
    // Predicated region
    $region42: #{tpu_custom_call.1} parent=1 // pred_check
      _
    $region43: #{tpu_custom_call.1} parent=1 // pred_check_branch
      %102 = sbr.rel (0) target = $region45
    $region44: #{tpu_custom_call.1} parent=1 // pred_region
      _
    $region45: #{tpu_custom_call.1} parent=1 // pred_fallthru
      _
    // Predicated region
    $region46: #{tpu_custom_call.1} parent=1 // pred_check
      _
    $region47: #{tpu_custom_call.1} parent=1 // pred_check_branch
      %104 = sbr.rel (0) target = $region49
    $region48: #{tpu_custom_call.1} parent=1 // pred_region
      %105 = dma.done [#allocation3], 256
    $region49: #{tpu_custom_call.1} parent=1 // pred_fallthru
      _
    // Predicated region
    $region50: #{tpu_custom_call.1} parent=1 // pred_check
      _
    $region51: #{tpu_custom_call.1} parent=1 // pred_check_branch
      %107 = sbr.rel (0) target = $region53
    $region52: #{tpu_custom_call.1} parent=1 // pred_region
      %108 = dma.done [#allocation6], 256
    $region53: #{tpu_custom_call.1} parent=1 // pred_fallthru
      _
    // Predicated region
    $region54: #{tpu_custom_call.1} parent=1 // pred_check
      _
    $region55: #{tpu_custom_call.1} parent=1 // pred_check_branch
      %110 = sbr.rel (0) target = $region57
    $region56: #{tpu_custom_call.1} parent=1 // pred_region
      %111 = dma.done [#allocation6], 2048
    $region57: #{tpu_custom_call.1} parent=1 // pred_fallthru
      _
    // Predicated region
    $region58: #{tpu_custom_call.1} parent=1 // pred_check
      _
    $region59: #{tpu_custom_call.1} parent=1 // pred_check_branch
      %113 = sbr.rel (0) target = $region61
    $region60: #{tpu_custom_call.1} parent=1 // pred_region
      %114 = dma.done [#allocation9], 2048
    $region61: #{tpu_custom_call.1} parent=1 // pred_fallthru
      _
    // Predicated region
    $region62: #{tpu_custom_call.1} parent=1 // pred_check
      _
    $region63: #{tpu_custom_call.1} parent=1 // pred_check_branch
      %116 = sbr.rel (0) target = $region65
    $region64: #{tpu_custom_call.1} parent=1 // pred_region
      %117 = dma.done [#allocation9], 2048
    $region65: #{tpu_custom_call.1} parent=1 // pred_fallthru
      _
    // Predicated region
    $region66: #{tpu_custom_call.1} parent=1 // pred_check
      _
    $region67: #{tpu_custom_call.1} parent=1 // pred_check_branch
      %119 = sbr.rel (0) target = $region69
    $region68: #{tpu_custom_call.1} parent=1 // pred_region
      %120 = dma.done [#allocation12], 2048
    $region69: #{tpu_custom_call.1} parent=1 // pred_fallthru
      _
    %v121 = vld [vmem:[#allocation2] sm:$0xff]
    %v122 = vld [vmem:[#allocation2 + $0x8] sm:$0xff]
    %v123 = vld [vmem:[#allocation5] sm:$0xff]
    %v124 = vld [vmem:[#allocation5 + $0x8] sm:$0xff]
    %v125 = vld [vmem:[%s2] sm:$0x1]
    %v127 = vlaneseq
    %v128 = vshrl.u32 %v127, 7
    %v129 = vsub.s32 0, %v128
    %v130 = vrot.slane %v125, %v129
    %vm132 = vcmask 130048
    %v134 = vsel %vm132, %v121, 0
    %v137 = vsel %vm132, %v122, 0
    %139 = vmatprep.subr.mxu0 0.0
    %140 = vmatpush1.msra.mxu0 %v123
    %141 = vmatprep.subr.mxu0 0.0
    %142 = vmatpush1.msra.mxu0 %v124
    %143 = vmatprep.subr.mxu0 0.0
    %144 = vmatpush1.msra.mxu0 0.0
    %145 = vmatprep.subr.mxu0 0.0
    %146 = vmatpush1.msra.mxu0 0.0
    %147 = vmatprep.subr.mxu0 0.0
    %148 = vmatpush1.msra.mxu0 0.0
    %149 = vmatprep.subr.mxu0 0.0
    %150 = vmatpush1.msra.mxu0 0.0
    %151 = vmatprep.subr.mxu0 0.0
    %152 = vmatpush1.msra.mxu0 0.0
    %153 = vmatprep.subr.mxu0 0.0
    %154 = vmatpush1.msra.mxu0 0.0
    %155 = vmatprep.subr.mxu0 0.0
    %156 = vmatpush1.msra.mxu0 0.0
    %157 = vmatprep.subr.mxu0 0.0
    %158 = vmatpush1.msra.mxu0 0.0
    %159 = vmatprep.subr.mxu0 0.0
    %160 = vmatpush1.msra.mxu0 0.0
    %161 = vmatprep.subr.mxu0 0.0
    %162 = vmatpush1.msra.mxu0 0.0
    %163 = vmatprep.subr.mxu0 0.0
    %164 = vmatpush1.msra.mxu0 0.0
    %165 = vmatprep.subr.mxu0 0.0
    %166 = vmatpush1.msra.mxu0 0.0
    %167 = vmatprep.subr.mxu0 0.0
    %168 = vmatpush1.msra.mxu0 0.0
    %169 = vmatprep.subr.mxu0 0.0
    %170 = vmatpush1.msra.mxu0 0.0
    %171 = vmatprep.subr.mxu0 0.0
    %172 = vmatpush1.msra.mxu0 0.0
    %173 = vmatprep.subr.mxu0 0.0
    %174 = vmatpush1.msra.mxu0 0.0
    %175 = vmatprep.subr.mxu0 0.0
    %176 = vmatpush1.msra.mxu0 0.0
    %177 = vmatprep.subr.mxu0 0.0
    %178 = vmatpush1.msra.mxu0 0.0
    %179 = vmatprep.subr.mxu0 0.0
    %180 = vmatpush1.msra.mxu0 0.0
    %181 = vmatprep.subr.mxu0 0.0
    %182 = vmatpush1.msra.mxu0 0.0
    %183 = vmatprep.subr.mxu0 0.0
    %184 = vmatpush1.msra.mxu0 0.0
    %185 = vmatprep.subr.mxu0 0.0
    %186 = vmatpush1.msra.mxu0 0.0
    %187 = vmatprep.subr.mxu0 0.0
    %188 = vmatpush1.msra.mxu0 0.0
    %189 = vmatprep.subr.mxu0 0.0
    %190 = vmatpush1.msra.mxu0 0.0
    %191 = vmatprep.subr.mxu0 0.0
    %192 = vmatpush1.msra.mxu0 0.0
    %193 = vmatprep.subr.mxu0 0.0
    %194 = vmatpush1.msra.mxu0 0.0
    %195 = vmatprep.subr.mxu0 0.0
    %196 = vmatpush1.msra.mxu0 0.0
    %197 = vmatprep.subr.mxu0 0.0
    %198 = vmatpush1.msra.mxu0 0.0
    %199 = vmatprep.subr.mxu0 0.0
    %200 = vmatpush1.msra.mxu0 0.0
    %201 = vmatprep.subr.mxu0 0.0
    %202 = vmatpush1.msra.mxu0 0.0
    %203 = vmatprep.mubr.f32.mxu0 0.0
    %204 = vmatmul.mubr.f32.gmra.mrb[0].mxu0 %v134
    %v205 = vpop.f32.mrb[0].mxu0
    %v206 = vadd.f32 %v130, %v205
    %v207 = vpop.f32.mrb[0].mxu0
    %208 = vmatprep.mubr.f32.mxu0 0.0
    %209 = vmatmul.mubr.f32.gmra.mrb[0].mxu0 %v137
    %v210 = vpop.f32.mrb[0].mxu0
    %v211 = vadd.f32 %v130, %v210
    %v212 = vpop.f32.mrb[0].mxu0
    %213 = vdwg.mxu0
    %v214 = vmul.f32 %v206, 0.01
    %v215 = vmul.f32 %v211, 0.01
    %v216 = vmax.f32 %v206, %v214
    %v217 = vmax.f32 %v211, %v215
    %v218 = vld [vmem:[#allocation7] sm:$0xff]
    %v219 = vld [vmem:[#allocation7 + $0x8] sm:$0xff]
    %v220 = vld [vmem:[#allocation7 + $0x10] sm:$0xff]
    %v221 = vld [vmem:[#allocation7 + $0x18] sm:$0xff]
    %v222 = vld [vmem:[#allocation7 + $0x20] sm:$0xff]
    %v223 = vld [vmem:[#allocation7 + $0x28] sm:$0xff]
    %v224 = vld [vmem:[#allocation7 + $0x30] sm:$0xff]
    %v225 = vld [vmem:[#allocation7 + $0x38] sm:$0xff]
    %v226 = vld [vmem:[#allocation7 + $0x40] sm:$0xff]
    %v227 = vld [vmem:[#allocation7 + $0x48] sm:$0xff]
    %v228 = vld [vmem:[#allocation7 + $0x50] sm:$0xff]
    %v229 = vld [vmem:[#allocation7 + $0x58] sm:$0xff]
    %v230 = vld [vmem:[#allocation7 + $0x60] sm:$0xff]
    %v231 = vld [vmem:[#allocation7 + $0x68] sm:$0xff]
    %v232 = vld [vmem:[#allocation7 + $0x70] sm:$0xff]
    %v233 = vld [vmem:[#allocation7 + $0x78] sm:$0xff]
    %v234 = vld [vmem:[%s4] sm:$0x1]
    %v236 = vlaneseq
    %v237 = vshrl.u32 %v236, 7
    %v238 = vsub.s32 0, %v237
    %v239 = vrot.slane %v234, %v238
    %241 = vmatprep.subr.mxu0 0.0
    %242 = vmatpush1.msra.mxu0 %v218
    %243 = vmatprep.subr.mxu0 0.0
    %244 = vmatpush1.msra.mxu0 %v219
    %245 = vmatprep.subr.mxu0 0.0
    %246 = vmatpush1.msra.mxu0 %v220
    %247 = vmatprep.subr.mxu0 0.0
    %248 = vmatpush1.msra.mxu0 %v221
    %249 = vmatprep.subr.mxu0 0.0
    %250 = vmatpush1.msra.mxu0 %v222
    %251 = vmatprep.subr.mxu0 0.0
    %252 = vmatpush1.msra.mxu0 %v223
    %253 = vmatprep.subr.mxu0 0.0
    %254 = vmatpush1.msra.mxu0 %v224
    %255 = vmatprep.subr.mxu0 0.0
    %256 = vmatpush1.msra.mxu0 %v225
    %257 = vmatprep.subr.mxu0 0.0
    %258 = vmatpush1.msra.mxu0 %v226
    %259 = vmatprep.subr.mxu0 0.0
    %260 = vmatpush1.msra.mxu0 %v227
    %261 = vmatprep.subr.mxu0 0.0
    %262 = vmatpush1.msra.mxu0 %v228
    %263 = vmatprep.subr.mxu0 0.0
    %264 = vmatpush1.msra.mxu0 %v229
    %265 = vmatprep.subr.mxu0 0.0
    %266 = vmatpush1.msra.mxu0 %v230
    %267 = vmatprep.subr.mxu0 0.0
    %268 = vmatpush1.msra.mxu0 %v231
    %269 = vmatprep.subr.mxu0 0.0
    %270 = vmatpush1.msra.mxu0 %v232
    %271 = vmatprep.subr.mxu0 0.0
    %272 = vmatpush1.msra.mxu0 %v233
    %273 = vmatprep.subr.mxu0 0.0
    %274 = vmatpush1.msra.mxu0 0.0
    %275 = vmatprep.subr.mxu0 0.0
    %276 = vmatpush1.msra.mxu0 0.0
    %277 = vmatprep.subr.mxu0 0.0
    %278 = vmatpush1.msra.mxu0 0.0
    %279 = vmatprep.subr.mxu0 0.0
    %280 = vmatpush1.msra.mxu0 0.0
    %281 = vmatprep.subr.mxu0 0.0
    %282 = vmatpush1.msra.mxu0 0.0
    %283 = vmatprep.subr.mxu0 0.0
    %284 = vmatpush1.msra.mxu0 0.0
    %285 = vmatprep.subr.mxu0 0.0
    %286 = vmatpush1.msra.mxu0 0.0
    %287 = vmatprep.subr.mxu0 0.0
    %288 = vmatpush1.msra.mxu0 0.0
    %289 = vmatprep.subr.mxu0 0.0
    %290 = vmatpush1.msra.mxu0 0.0
    %291 = vmatprep.subr.mxu0 0.0
    %292 = vmatpush1.msra.mxu0 0.0
    %293 = vmatprep.subr.mxu0 0.0
    %294 = vmatpush1.msra.mxu0 0.0
    %295 = vmatprep.subr.mxu0 0.0
    %296 = vmatpush1.msra.mxu0 0.0
    %297 = vmatprep.subr.mxu0 0.0
    %298 = vmatpush1.msra.mxu0 0.0
    %299 = vmatprep.subr.mxu0 0.0
    %300 = vmatpush1.msra.mxu0 0.0
    %301 = vmatprep.subr.mxu0 0.0
    %302 = vmatpush1.msra.mxu0 0.0
    %303 = vmatprep.subr.mxu0 0.0
    %304 = vmatpush1.msra.mxu0 0.0
    %305 = vmatprep.mubr.f32.mxu0 0.0
    %306 = vmatmul.mubr.f32.gmra.mrb[0].mxu0 %v216
    %v307 = vpop.f32.mrb[0].mxu0
    %v308 = vadd.f32 %v239, %v307
    %v309 = vpop.f32.mrb[0].mxu0
    %310 = vmatprep.mubr.f32.mxu0 0.0
    %311 = vmatmul.mubr.f32.gmra.mrb[0].mxu0 %v217
    %v312 = vpop.f32.mrb[0].mxu0
    %v313 = vadd.f32 %v239, %v312
    %v314 = vpop.f32.mrb[0].mxu0
    %315 = vdwg.mxu0
    %v316 = vmul.f32 %v308, 0.01
    %v317 = vmul.f32 %v313, 0.01
    %v318 = vmax.f32 %v308, %v316
    %v319 = vmax.f32 %v313, %v317
    %v320 = vld [vmem:[#allocation8] sm:$0xff]
    %v321 = vld [vmem:[#allocation8 + $0x8] sm:$0xff]
    %v322 = vld [vmem:[#allocation8 + $0x10] sm:$0xff]
    %v323 = vld [vmem:[#allocation8 + $0x18] sm:$0xff]
    %v324 = vld [vmem:[#allocation8 + $0x20] sm:$0xff]
    %v325 = vld [vmem:[#allocation8 + $0x28] sm:$0xff]
    %v326 = vld [vmem:[#allocation8 + $0x30] sm:$0xff]
    %v327 = vld [vmem:[#allocation8 + $0x38] sm:$0xff]
    %v328 = vld [vmem:[#allocation8 + $0x40] sm:$0xff]
    %v329 = vld [vmem:[#allocation8 + $0x48] sm:$0xff]
    %v330 = vld [vmem:[#allocation8 + $0x50] sm:$0xff]
    %v331 = vld [vmem:[#allocation8 + $0x58] sm:$0xff]
    %v332 = vld [vmem:[#allocation8 + $0x60] sm:$0xff]
    %v333 = vld [vmem:[#allocation8 + $0x68] sm:$0xff]
    %v334 = vld [vmem:[#allocation8 + $0x70] sm:$0xff]
    %v335 = vld [vmem:[#allocation8 + $0x78] sm:$0xff]
    %v336 = vld [vmem:[%s6] sm:$0x1]
    %v338 = vlaneseq
    %v339 = vshrl.u32 %v338, 7
    %v340 = vsub.s32 0, %v339
    %v341 = vrot.slane %v336, %v340
    %343 = vmatprep.subr.mxu0 0.0
    %344 = vmatpush1.msra.mxu0 %v320
    %345 = vmatprep.subr.mxu0 0.0
    %346 = vmatpush1.msra.mxu0 %v321
    %347 = vmatprep.subr.mxu0 0.0
    %348 = vmatpush1.msra.mxu0 %v322
    %349 = vmatprep.subr.mxu0 0.0
    %350 = vmatpush1.msra.mxu0 %v323
    %351 = vmatprep.subr.mxu0 0.0
    %352 = vmatpush1.msra.mxu0 %v324
    %353 = vmatprep.subr.mxu0 0.0
    %354 = vmatpush1.msra.mxu0 %v325
    %355 = vmatprep.subr.mxu0 0.0
    %356 = vmatpush1.msra.mxu0 %v326
    %357 = vmatprep.subr.mxu0 0.0
    %358 = vmatpush1.msra.mxu0 %v327
    %359 = vmatprep.subr.mxu0 0.0
    %360 = vmatpush1.msra.mxu0 %v328
    %361 = vmatprep.subr.mxu0 0.0
    %362 = vmatpush1.msra.mxu0 %v329
    %363 = vmatprep.subr.mxu0 0.0
    %364 = vmatpush1.msra.mxu0 %v330
    %365 = vmatprep.subr.mxu0 0.0
    %366 = vmatpush1.msra.mxu0 %v331
    %367 = vmatprep.subr.mxu0 0.0
    %368 = vmatpush1.msra.mxu0 %v332
    %369 = vmatprep.subr.mxu0 0.0
    %370 = vmatpush1.msra.mxu0 %v333
    %371 = vmatprep.subr.mxu0 0.0
    %372 = vmatpush1.msra.mxu0 %v334
    %373 = vmatprep.subr.mxu0 0.0
    %374 = vmatpush1.msra.mxu0 %v335
    %375 = vmatprep.subr.mxu0 0.0
    %376 = vmatpush1.msra.mxu0 0.0
    %377 = vmatprep.subr.mxu0 0.0
    %378 = vmatpush1.msra.mxu0 0.0
    %379 = vmatprep.subr.mxu0 0.0
    %380 = vmatpush1.msra.mxu0 0.0
    %381 = vmatprep.subr.mxu0 0.0
    %382 = vmatpush1.msra.mxu0 0.0
    %383 = vmatprep.subr.mxu0 0.0
    %384 = vmatpush1.msra.mxu0 0.0
    %385 = vmatprep.subr.mxu0 0.0
    %386 = vmatpush1.msra.mxu0 0.0
    %387 = vmatprep.subr.mxu0 0.0
    %388 = vmatpush1.msra.mxu0 0.0
    %389 = vmatprep.subr.mxu0 0.0
    %390 = vmatpush1.msra.mxu0 0.0
    %391 = vmatprep.subr.mxu0 0.0
    %392 = vmatpush1.msra.mxu0 0.0
    %393 = vmatprep.subr.mxu0 0.0
    %394 = vmatpush1.msra.mxu0 0.0
    %395 = vmatprep.subr.mxu0 0.0
    %396 = vmatpush1.msra.mxu0 0.0
    %397 = vmatprep.subr.mxu0 0.0
    %398 = vmatpush1.msra.mxu0 0.0
    %399 = vmatprep.subr.mxu0 0.0
    %400 = vmatpush1.msra.mxu0 0.0
    %401 = vmatprep.subr.mxu0 0.0
    %402 = vmatpush1.msra.mxu0 0.0
    %403 = vmatprep.subr.mxu0 0.0
    %404 = vmatpush1.msra.mxu0 0.0
    %405 = vmatprep.subr.mxu0 0.0
    %406 = vmatpush1.msra.mxu0 0.0
    %407 = vmatprep.mubr.f32.mxu0 0.0
    %408 = vmatmul.mubr.f32.gmra.mrb[0].mxu0 %v318
    %v409 = vpop.f32.mrb[0].mxu0
    %v410 = vadd.f32 %v341, %v409
    %v411 = vpop.f32.mrb[0].mxu0
    %412 = vmatprep.mubr.f32.mxu0 0.0
    %413 = vmatmul.mubr.f32.gmra.mrb[0].mxu0 %v319
    %v414 = vpop.f32.mrb[0].mxu0
    %v415 = vadd.f32 %v341, %v414
    %v416 = vpop.f32.mrb[0].mxu0
    %417 = vdwg.mxu0
    %v418 = vmul.f32 %v410, 0.01
    %v419 = vmul.f32 %v415, 0.01
    %v420 = vmax.f32 %v410, %v418
    %v421 = vmax.f32 %v415, %v419
    %v422 = vld [vmem:[#allocation10] sm:$0xff]
    %v423 = vld [vmem:[#allocation10 + $0x8] sm:$0xff]
    %v424 = vld [vmem:[#allocation10 + $0x10] sm:$0xff]
    %v425 = vld [vmem:[#allocation10 + $0x18] sm:$0xff]
    %v426 = vld [vmem:[#allocation10 + $0x20] sm:$0xff]
    %v427 = vld [vmem:[#allocation10 + $0x28] sm:$0xff]
    %v428 = vld [vmem:[#allocation10 + $0x30] sm:$0xff]
    %v429 = vld [vmem:[#allocation10 + $0x38] sm:$0xff]
    %v430 = vld [vmem:[#allocation10 + $0x40] sm:$0xff]
    %v431 = vld [vmem:[#allocation10 + $0x48] sm:$0xff]
    %v432 = vld [vmem:[#allocation10 + $0x50] sm:$0xff]
    %v433 = vld [vmem:[#allocation10 + $0x58] sm:$0xff]
    %v434 = vld [vmem:[#allocation10 + $0x60] sm:$0xff]
    %v435 = vld [vmem:[#allocation10 + $0x68] sm:$0xff]
    %v436 = vld [vmem:[#allocation10 + $0x70] sm:$0xff]
    %v437 = vld [vmem:[#allocation10 + $0x78] sm:$0xff]
    %v438 = vld [vmem:[%s8] sm:$0x1]
    %v440 = vlaneseq
    %v441 = vshrl.u32 %v440, 7
    %v442 = vsub.s32 0, %v441
    %v443 = vrot.slane %v438, %v442
    %445 = vmatprep.subr.mxu0 0.0
    %446 = vmatpush1.msra.mxu0 %v422
    %447 = vmatprep.subr.mxu0 0.0
    %448 = vmatpush1.msra.mxu0 %v423
    %449 = vmatprep.subr.mxu0 0.0
    %450 = vmatpush1.msra.mxu0 %v424
    %451 = vmatprep.subr.mxu0 0.0
    %452 = vmatpush1.msra.mxu0 %v425
    %453 = vmatprep.subr.mxu0 0.0
    %454 = vmatpush1.msra.mxu0 %v426
    %455 = vmatprep.subr.mxu0 0.0
    %456 = vmatpush1.msra.mxu0 %v427
    %457 = vmatprep.subr.mxu0 0.0
    %458 = vmatpush1.msra.mxu0 %v428
    %459 = vmatprep.subr.mxu0 0.0
    %460 = vmatpush1.msra.mxu0 %v429
    %461 = vmatprep.subr.mxu0 0.0
    %462 = vmatpush1.msra.mxu0 %v430
    %463 = vmatprep.subr.mxu0 0.0
    %464 = vmatpush1.msra.mxu0 %v431
    %465 = vmatprep.subr.mxu0 0.0
    %466 = vmatpush1.msra.mxu0 %v432
    %467 = vmatprep.subr.mxu0 0.0
    %468 = vmatpush1.msra.mxu0 %v433
    %469 = vmatprep.subr.mxu0 0.0
    %470 = vmatpush1.msra.mxu0 %v434
    %471 = vmatprep.subr.mxu0 0.0
    %472 = vmatpush1.msra.mxu0 %v435
    %473 = vmatprep.subr.mxu0 0.0
    %474 = vmatpush1.msra.mxu0 %v436
    %475 = vmatprep.subr.mxu0 0.0
    %476 = vmatpush1.msra.mxu0 %v437
    %477 = vmatprep.subr.mxu0 0.0
    %478 = vmatpush1.msra.mxu0 0.0
    %479 = vmatprep.subr.mxu0 0.0
    %480 = vmatpush1.msra.mxu0 0.0
    %481 = vmatprep.subr.mxu0 0.0
    %482 = vmatpush1.msra.mxu0 0.0
    %483 = vmatprep.subr.mxu0 0.0
    %484 = vmatpush1.msra.mxu0 0.0
    %485 = vmatprep.subr.mxu0 0.0
    %486 = vmatpush1.msra.mxu0 0.0
    %487 = vmatprep.subr.mxu0 0.0
    %488 = vmatpush1.msra.mxu0 0.0
    %489 = vmatprep.subr.mxu0 0.0
    %490 = vmatpush1.msra.mxu0 0.0
    %491 = vmatprep.subr.mxu0 0.0
    %492 = vmatpush1.msra.mxu0 0.0
    %493 = vmatprep.subr.mxu0 0.0
    %494 = vmatpush1.msra.mxu0 0.0
    %495 = vmatprep.subr.mxu0 0.0
    %496 = vmatpush1.msra.mxu0 0.0
    %497 = vmatprep.subr.mxu0 0.0
    %498 = vmatpush1.msra.mxu0 0.0
    %499 = vmatprep.subr.mxu0 0.0
    %500 = vmatpush1.msra.mxu0 0.0
    %501 = vmatprep.subr.mxu0 0.0
    %502 = vmatpush1.msra.mxu0 0.0
    %503 = vmatprep.subr.mxu0 0.0
    %504 = vmatpush1.msra.mxu0 0.0
    %505 = vmatprep.subr.mxu0 0.0
    %506 = vmatpush1.msra.mxu0 0.0
    %507 = vmatprep.subr.mxu0 0.0
    %508 = vmatpush1.msra.mxu0 0.0
    %509 = vmatprep.mubr.f32.mxu0 0.0
    %510 = vmatmul.mubr.f32.gmra.mrb[0].mxu0 %v420
    %v511 = vpop.f32.mrb[0].mxu0
    %v512 = vadd.f32 %v443, %v511
    %v513 = vpop.f32.mrb[0].mxu0
    %514 = vmatprep.mubr.f32.mxu0 0.0
    %515 = vmatmul.mubr.f32.gmra.mrb[0].mxu0 %v421
    %v516 = vpop.f32.mrb[0].mxu0
    %v517 = vadd.f32 %v443, %v516
    %v518 = vpop.f32.mrb[0].mxu0
    %519 = vdwg.mxu0
    %v520 = vmul.f32 %v512, 0.01
    %v521 = vmul.f32 %v517, 0.01
    %v522 = vmax.f32 %v512, %v520
    %v523 = vmax.f32 %v517, %v521
    %v524 = vld [vmem:[#allocation11] sm:$0xff]
    %v525 = vld [vmem:[#allocation11 + $0x8] sm:$0xff]
    %v526 = vld [vmem:[#allocation11 + $0x10] sm:$0xff]
    %v527 = vld [vmem:[#allocation11 + $0x18] sm:$0xff]
    %v528 = vld [vmem:[#allocation11 + $0x20] sm:$0xff]
    %v529 = vld [vmem:[#allocation11 + $0x28] sm:$0xff]
    %v530 = vld [vmem:[#allocation11 + $0x30] sm:$0xff]
    %v531 = vld [vmem:[#allocation11 + $0x38] sm:$0xff]
    %v532 = vld [vmem:[#allocation11 + $0x40] sm:$0xff]
    %v533 = vld [vmem:[#allocation11 + $0x48] sm:$0xff]
    %v534 = vld [vmem:[#allocation11 + $0x50] sm:$0xff]
    %v535 = vld [vmem:[#allocation11 + $0x58] sm:$0xff]
    %v536 = vld [vmem:[#allocation11 + $0x60] sm:$0xff]
    %v537 = vld [vmem:[#allocation11 + $0x68] sm:$0xff]
    %v538 = vld [vmem:[#allocation11 + $0x70] sm:$0xff]
    %v539 = vld [vmem:[#allocation11 + $0x78] sm:$0xff]
    %v540 = vld [vmem:[%s10] sm:$0x1]
    %v542 = vlaneseq
    %v543 = vshrl.u32 %v542, 7
    %v544 = vsub.s32 0, %v543
    %v545 = vrot.slane %v540, %v544
    %547 = vmatprep.subr.mxu0 0.0
    %548 = vmatpush1.msra.mxu0 %v524
    %549 = vmatprep.subr.mxu0 0.0
    %550 = vmatpush1.msra.mxu0 %v525
    %551 = vmatprep.subr.mxu0 0.0
    %552 = vmatpush1.msra.mxu0 %v526
    %553 = vmatprep.subr.mxu0 0.0
    %554 = vmatpush1.msra.mxu0 %v527
    %555 = vmatprep.subr.mxu0 0.0
    %556 = vmatpush1.msra.mxu0 %v528
    %557 = vmatprep.subr.mxu0 0.0
    %558 = vmatpush1.msra.mxu0 %v529
    %559 = vmatprep.subr.mxu0 0.0
    %560 = vmatpush1.msra.mxu0 %v530
    %561 = vmatprep.subr.mxu0 0.0
    %562 = vmatpush1.msra.mxu0 %v531
    %563 = vmatprep.subr.mxu0 0.0
    %564 = vmatpush1.msra.mxu0 %v532
    %565 = vmatprep.subr.mxu0 0.0
    %566 = vmatpush1.msra.mxu0 %v533
    %567 = vmatprep.subr.mxu0 0.0
    %568 = vmatpush1.msra.mxu0 %v534
    %569 = vmatprep.subr.mxu0 0.0
    %570 = vmatpush1.msra.mxu0 %v535
    %571 = vmatprep.subr.mxu0 0.0
    %572 = vmatpush1.msra.mxu0 %v536
    %573 = vmatprep.subr.mxu0 0.0
    %574 = vmatpush1.msra.mxu0 %v537
    %575 = vmatprep.subr.mxu0 0.0
    %576 = vmatpush1.msra.mxu0 %v538
    %577 = vmatprep.subr.mxu0 0.0
    %578 = vmatpush1.msra.mxu0 %v539
    %579 = vmatprep.subr.mxu0 0.0
    %580 = vmatpush1.msra.mxu0 0.0
    %581 = vmatprep.subr.mxu0 0.0
    %582 = vmatpush1.msra.mxu0 0.0
    %583 = vmatprep.subr.mxu0 0.0
    %584 = vmatpush1.msra.mxu0 0.0
    %585 = vmatprep.subr.mxu0 0.0
    %586 = vmatpush1.msra.mxu0 0.0
    %587 = vmatprep.subr.mxu0 0.0
    %588 = vmatpush1.msra.mxu0 0.0
    %589 = vmatprep.subr.mxu0 0.0
    %590 = vmatpush1.msra.mxu0 0.0
    %591 = vmatprep.subr.mxu0 0.0
    %592 = vmatpush1.msra.mxu0 0.0
    %593 = vmatprep.subr.mxu0 0.0
    %594 = vmatpush1.msra.mxu0 0.0
    %595 = vmatprep.subr.mxu0 0.0
    %596 = vmatpush1.msra.mxu0 0.0
    %597 = vmatprep.subr.mxu0 0.0
    %598 = vmatpush1.msra.mxu0 0.0
    %599 = vmatprep.subr.mxu0 0.0
    %600 = vmatpush1.msra.mxu0 0.0
    %601 = vmatprep.subr.mxu0 0.0
    %602 = vmatpush1.msra.mxu0 0.0
    %603 = vmatprep.subr.mxu0 0.0
    %604 = vmatpush1.msra.mxu0 0.0
    %605 = vmatprep.subr.mxu0 0.0
    %606 = vmatpush1.msra.mxu0 0.0
    %607 = vmatprep.subr.mxu0 0.0
    %608 = vmatpush1.msra.mxu0 0.0
    %609 = vmatprep.subr.mxu0 0.0
    %610 = vmatpush1.msra.mxu0 0.0
    %611 = vmatprep.mubr.f32.mxu0 0.0
    %612 = vmatmul.mubr.f32.gmra.mrb[0].mxu0 %v522
    %v613 = vpop.f32.mrb[0].mxu0
    %v614 = vadd.f32 %v545, %v613
    %v615 = vpop.f32.mrb[0].mxu0
    %616 = vmatprep.mubr.f32.mxu0 0.0
    %617 = vmatmul.mubr.f32.gmra.mrb[0].mxu0 %v523
    %v618 = vpop.f32.mrb[0].mxu0
    %v619 = vadd.f32 %v545, %v618
    %v620 = vpop.f32.mrb[0].mxu0
    %621 = vdwg.mxu0
    %622 = vst [vmem:[#allocation13] sm:$0xff] %v614
    %623 = vst [vmem:[#allocation13 + $0x8] sm:$0xff] %v619
    // Predicated region
    $region70: #{tpu_custom_call.1} parent=1 // pred_check
      _
    $region71: #{tpu_custom_call.1} parent=1 // pred_check_branch
      %625 = sbr.rel (0) target = $region73
    $region72: #{tpu_custom_call.1} parent=1 // pred_region
      %s627 = ssub.s32 256, 256
      %628 = vsyncadd [#allocation4], %s627
      %s629 = sshll.u32 [#allocation13], 4
      %s630 = int_to_ptr.vmem [resolvable:$true] %s629
      %635 = dma.vmem_to_hbm [thread:$0]  %s630, 256, %s11, [#allocation4], 128, 128, 8
    $region73: #{tpu_custom_call.1} parent=1 // pred_fallthru
      _
    // Predicated region
    $region74: #{tpu_custom_call.1} parent=1 // pred_check
      _
    $region75: #{tpu_custom_call.1} parent=1 // pred_check_branch
      %637 = sbr.rel (0) target = $region77
    $region76: #{tpu_custom_call.1} parent=1 // pred_region
      %638 = dma.done [#allocation4], 256
    $region77: #{tpu_custom_call.1} parent=1 // pred_fallthru
      _
    %639 = vsyncpa [#allocation3], 1
    %640 = vsyncpa [#allocation6], 1
    %641 = vsyncpa [#allocation9], 1
    %642 = vsyncpa [#allocation12], 1
    %643 = vsyncpa [#allocation4], 1

</llo_original>
